<compile_context>
chip_gen: v6e
topology: v6e:2x2x1
jax: 0.10.0
libtpu: 0.0.40
codegen_flags: <defaults>
</compile_context>

<pallas_src>
import functools

import jax
import jax.numpy as jnp
from jax.experimental import pallas as pl
from jax.experimental.pallas import tpu as pltpu

NUMBER_OF_MODELS = 4


def _round_up(n, m):
    return ((n + m - 1) // m) * m


def _final_perceptron_kernel(x_ref, w_ref, b_ref, o_ref):
    # x_ref: (S, 128*D) f32 VMEM -- 128 samples x D interleaved features per row.
    # w_ref: (128*D, 128) f32 VMEM -- selection matrix W[D*j + f, j] = w[f] (resident).
    # b_ref: (1,) f32 SMEM -- bias scalar.
    # o_ref: (S, 128) f32 VMEM -- sample (128*row + lane); fully dense stores.
    z = jnp.dot(
        x_ref[...], w_ref[...],
        preferred_element_type=jnp.float32,
        precision=jax.lax.Precision.HIGHEST,
    ) + b_ref[0]
    # sigmoid(z) = 0.5 * tanh(0.5 * z) + 0.5: one EUP op per element, numerically stable.
    o_ref[...] = (0.5 * jnp.tanh(0.5 * z) + 0.5).astype(o_ref.dtype)


@functools.partial(jax.jit, static_argnames=("block_rows",))
def final_perceptron(x, weight, bias, *, block_rows=1024):
    """sigmoid(x @ weight.T + bias), matching torch.sigmoid(nn.Linear(D, 1)(x)).

    x: (B, D) float, weight: (1, D) (PyTorch nn.Linear layout), bias: (1,).
    Returns (B, 1) float32.
    """
    B, D = x.shape
    x = x.astype(jnp.float32)

    # Pad the batch only to a multiple of 8*128 (sublane alignment for the reshape),
    # NOT to the tile size.  No transpose: the reshape below is metadata-only.
    b_pad = _round_up(B, 8 * 128)
    if b_pad != B:
        x = jnp.pad(x, ((0, b_pad - B), (0, 0)))
    rows = b_pad // 128                      # sublane rows, multiple of 8
    x2 = x.reshape(rows, 128 * D)            # row r, col c -> sample 128r + c//D, feature c%D

    # Block-diagonal selection matrix: W[D*j + f, j] = w[f].  One MXU matmul then does
    # both the per-sample D-feature contraction and the lane compaction to a dense slab.
    w = weight.reshape(D).astype(jnp.float32)
    W = (jnp.eye(128, dtype=jnp.float32)[:, None, :] * w[None, :, None]).reshape(128 * D, 128)
    b = bias.reshape(1).astype(jnp.float32)

    # Tile choice: large enough to amortize per-step overhead (~2 MiB x-tile at the
    # default), small enough for v5e's 16 MiB scoped VMEM when double-buffered, and
    # capped so the grid has >= 2 steps when possible (v7x 2-TC sharding).
    br = min(block_rows, rows)
    if rows >= 16:
        br = min(br, _round_up(pl.cdiv(rows, 2), 8))
    grid = (pl.cdiv(rows, br),)              # last tile may be ragged; padding stays minimal

    out = pl.pallas_call(
        _final_perceptron_kernel,
        out_shape=jax.ShapeDtypeStruct((rows, 128), jnp.float32),
        grid=grid,
        in_specs=[
            pl.BlockSpec((br, 128 * D), lambda i: (i, 0)),        # x tile (dense contiguous loads)
            pl.BlockSpec((128 * D, 128), lambda i: (0, 0)),       # weight matrix, resident in VMEM
            pl.BlockSpec(memory_space=pltpu.MemorySpace.SMEM),    # bias scalar
        ],
        out_specs=pl.BlockSpec((br, 128), lambda i: (i, 0)),      # lane+sublane dense output tile
        compiler_params=pltpu.CompilerParams(
            # batch tiles are independent -> shard across v7x's 2 TCs (no-op on v5e/v6e)
            dimension_semantics=("parallel",),
        ),
    )(x2, W, b)

    # Metadata-only reshape back to (B, 1): out[r, j] is the result for sample 128r + j.
    return out.reshape(-1)[:B].reshape(B, 1)


def init_params(key, input_size=NUMBER_OF_MODELS):
    # PyTorch nn.Linear default init: U(-1/sqrt(fan_in), 1/sqrt(fan_in)).
    k_w, k_b = jax.random.split(key)
    bound = 1.0 / jnp.sqrt(jnp.float32(input_size))
    weight = jax.random.uniform(k_w, (1, input_size), jnp.float32, -bound, bound)
    bias = jax.random.uniform(k_b, (1,), jnp.float32, -bound, bound)
    return weight, bias


if __name__ == "__main__":
    key = jax.random.PRNGKey(0)
    k_x, k_p = jax.random.split(key)
    weight, bias = init_params(k_p, NUMBER_OF_MODELS)

    # Small shapes consistent with the module.  batch=2500 exercises a multi-step grid
    # (2 parallel tiles), a ragged final tile and the minimal (multiple-of-1024) padding.
    for batch in (2, 300, 2500):
        x = jax.random.normal(jax.random.fold_in(k_x, batch),
                              (batch, NUMBER_OF_MODELS), jnp.float32)
        out = jax.block_until_ready(final_perceptron(x, weight, bias))

        # Elementwise f32 reference (avoids any XLA matmul-precision ambiguity).
        ref = jax.nn.sigmoid(
            jnp.sum(x * weight.reshape(1, -1), axis=1, keepdims=True) + bias)
        assert out.shape == (batch, 1)
        assert jnp.allclose(out, ref, atol=1e-4, rtol=1e-4), float(jnp.max(jnp.abs(out - ref)))

    print("KERNEL_OK")
</pallas_src>

<mosaic_0001>
module attributes {stable_mosaic.version = 11 : i64} {
  func.func @_final_perceptron_kernel(%arg0: i32, %arg1: memref<8x512xf32, #tpu.memory_space<vmem>>, %arg2: memref<512x128xf32, #tpu.memory_space<vmem>>, %arg3: memref<1xf32, #tpu.memory_space<smem>>, %arg4: memref<8x128xf32, #tpu.memory_space<vmem>>) attributes {dimension_semantics = [#tpu.dimension_semantics<parallel>], iteration_bounds = array<i64: 1>, scalar_prefetch = 0 : i64, scratch_operands = 0 : i64, tpu.core_type = #tpu.core_type<tc>, window_params = [{transform_indices = @transform_0, window_bounds = array<i64: 8, 512>}, {pipeline_mode = #tpu.pipeline_mode<synchronous>, transform_indices = @transform_1, window_bounds = array<i64: 512, 128>}, {transform_indices = @transform_2, window_bounds = array<i64: 1>}, {transform_indices = @transform_3, window_bounds = array<i64: 8, 128>}]} {
    %c0 = arith.constant 0 : index
    %c0_0 = arith.constant 0 : index
    %0 = vector.load %arg1[%c0, %c0_0] : memref<8x512xf32, #tpu.memory_space<vmem>>, vector<8x512xf32>
    %c0_1 = arith.constant 0 : index
    %c0_2 = arith.constant 0 : index
    %1 = vector.load %arg2[%c0_1, %c0_2] : memref<512x128xf32, #tpu.memory_space<vmem>>, vector<512x128xf32>
    %cst = arith.constant dense<0.000000e+00> : vector<8x128xf32>
    %2 = tpu.matmul %0, %1, %cst {dimension_numbers = #tpu.dot_dimension_numbers<[1], [0], [0], [1], [0, 0, 1, 1], [], []>, precision = #tpu.contract_precision<fp32>} : vector<8x512xf32>, vector<512x128xf32>, vector<8x128xf32> -> vector<8x128xf32>
    %c0_3 = arith.constant 0 : index
    %3 = memref.load %arg3[%c0_3] : memref<1xf32, #tpu.memory_space<smem>>
    %4 = vector.broadcast %3 : f32 to vector<8x128xf32>
    %5 = arith.addf %2, %4 : vector<8x128xf32>
    %cst_4 = arith.constant 5.000000e-01 : f32
    %6 = vector.broadcast %cst_4 : f32 to vector<8x128xf32>
    %7 = arith.mulf %6, %5 : vector<8x128xf32>
    %8 = math.tanh %7 : vector<8x128xf32>
    %cst_5 = arith.constant 5.000000e-01 : f32
    %9 = vector.broadcast %cst_5 : f32 to vector<8x128xf32>
    %10 = arith.mulf %9, %8 : vector<8x128xf32>
    %cst_6 = arith.constant 5.000000e-01 : f32
    %11 = vector.broadcast %cst_6 : f32 to vector<8x128xf32>
    %12 = arith.addf %10, %11 : vector<8x128xf32>
    %c0_7 = arith.constant 0 : index
    %c0_8 = arith.constant 0 : index
    %13 = vector.load %arg4[%c0_7, %c0_8] : memref<8x128xf32, #tpu.memory_space<vmem>>, vector<8x128xf32>
    tpu.vector_store %arg4[%c0_7, %c0_8], %12 {strides = array<i32>} : memref<8x128xf32, #tpu.memory_space<vmem>>, vector<8x128xf32>,
    return
  }
  func.func @transform_0(%arg0: i32) -> (i32, i32) {
    %c0_i32 = arith.constant 0 : i32
    %c0_i32_0 = arith.constant 0 : i32
    return %arg0, %c0_i32 : i32, i32
  }
  func.func @transform_1(%arg0: i32) -> (i32, i32) {
    %c0_i32 = arith.constant 0 : i32
    %c0_i32_0 = arith.constant 0 : i32
    %c0_i32_1 = arith.constant 0 : i32
    return %c0_i32, %c0_i32_0 : i32, i32
  }
  func.func @transform_2(%arg0: i32) -> i32 {
    %c0_i32 = arith.constant 0 : i32
    %c0_i32_0 = arith.constant 0 : i32
    return %c0_i32 : i32
  }
  func.func @transform_3(%arg0: i32) -> (i32, i32) {
    %c0_i32 = arith.constant 0 : i32
    %c0_i32_0 = arith.constant 0 : i32
    return %arg0, %c0_i32 : i32, i32
  }
}

</mosaic_0001>

<llo_original>
// kernel: final_perceptron.1
$region0: #{final_perceptron.1}
  #allocation0 [shape = 'u32[]', space=smem, size = 0x4, offset = 0x4, fixed_abs, tag = 'smem constant byte address 0x4 - core index']
  #allocation1 [shape = 'u32[144,128]{1,0:T(1,128)}', space=vmem, size = 0x12000, scoped, tag = 'internal scratch']
  #allocation2 [shape = 'f32[1]{0:T(128)S(6)}', space=smem, size = 0x200, scoped, tag = 'scoped memory for final_perceptron.1']
  %s0 = inlined_call_operand.vmem [shape: f32[8,512], index: 0, kind: input, shape index: {}]
  %s1 = inlined_call_operand.vmem [shape: f32[512,128], index: 1, kind: input, shape index: {}]
  %s2 = inlined_call_operand.<no memory space> [shape: f32[1], index: 2, kind: input, shape index: {}]
  %s3 = inlined_call_operand.vmem [shape: f32[8,128], index: 3, kind: output, shape index: {}]
  %s4 = sld [smem:[#allocation0]]
  $region22: #{final_perceptron.1} parent=0
    _
  %s6 = ssub.s32 1, %s4
  %s7 = scalar_select 0, %s6, %s4
  %8 = sst [smem:[#allocation2]] %s2
  // Predicated region
  $region2: #{final_perceptron.1} parent=0 // pred_check
    _
  $region3: #{final_perceptron.1} parent=0 // pred_check_branch
    %10 = sbr.rel (0) target = $region5
  $region4: #{final_perceptron.1} parent=0 // pred_region
    _
  $region5: #{final_perceptron.1} parent=0 // pred_fallthru
    _
  // Predicated region
  $region6: #{final_perceptron.1} parent=0 // pred_check
    _
  $region7: #{final_perceptron.1} parent=0 // pred_check_branch
    %12 = sbr.rel (0) target = $region9
  $region8: #{final_perceptron.1} parent=0 // pred_region
    _
  $region9: #{final_perceptron.1} parent=0 // pred_fallthru
    _
  // Predicated region
  $region10: #{final_perceptron.1} parent=0 // pred_check
    _
  $region11: #{final_perceptron.1} parent=0 // pred_check_branch
    %14 = sbr.rel (0) target = $region13
  $region12: #{final_perceptron.1} parent=0 // pred_region
    _
  $region13: #{final_perceptron.1} parent=0 // pred_fallthru
    _
  %v15 = vld [vmem:[%s0] sm:$0xff]
  %v16 = vld [vmem:[%s0 + $0x8] sm:$0xff]
  %v17 = vld [vmem:[%s0 + $0x10] sm:$0xff]
  %v18 = vld [vmem:[%s0 + $0x18] sm:$0xff]
  %v19 = vld [vmem:[%s1] sm:$0xff]
  %v20 = vld [vmem:[%s1 + $0x8] sm:$0xff]
  %v21 = vld [vmem:[%s1 + $0x10] sm:$0xff]
  %v22 = vld [vmem:[%s1 + $0x18] sm:$0xff]
  %v23 = vld [vmem:[%s1 + $0x20] sm:$0xff]
  %v24 = vld [vmem:[%s1 + $0x28] sm:$0xff]
  %v25 = vld [vmem:[%s1 + $0x30] sm:$0xff]
  %v26 = vld [vmem:[%s1 + $0x38] sm:$0xff]
  %v27 = vld [vmem:[%s1 + $0x40] sm:$0xff]
  %v28 = vld [vmem:[%s1 + $0x48] sm:$0xff]
  %v29 = vld [vmem:[%s1 + $0x50] sm:$0xff]
  %v30 = vld [vmem:[%s1 + $0x58] sm:$0xff]
  %v31 = vld [vmem:[%s1 + $0x60] sm:$0xff]
  %v32 = vld [vmem:[%s1 + $0x68] sm:$0xff]
  %v33 = vld [vmem:[%s1 + $0x70] sm:$0xff]
  %v34 = vld [vmem:[%s1 + $0x78] sm:$0xff]
  %v35 = vld [vmem:[%s1 + $0x80] sm:$0xff]
  %v36 = vld [vmem:[%s1 + $0x88] sm:$0xff]
  %v37 = vld [vmem:[%s1 + $0x90] sm:$0xff]
  %v38 = vld [vmem:[%s1 + $0x98] sm:$0xff]
  %v39 = vld [vmem:[%s1 + $0xa0] sm:$0xff]
  %v40 = vld [vmem:[%s1 + $0xa8] sm:$0xff]
  %v41 = vld [vmem:[%s1 + $0xb0] sm:$0xff]
  %v42 = vld [vmem:[%s1 + $0xb8] sm:$0xff]
  %v43 = vld [vmem:[%s1 + $0xc0] sm:$0xff]
  %v44 = vld [vmem:[%s1 + $0xc8] sm:$0xff]
  %v45 = vld [vmem:[%s1 + $0xd0] sm:$0xff]
  %v46 = vld [vmem:[%s1 + $0xd8] sm:$0xff]
  %v47 = vld [vmem:[%s1 + $0xe0] sm:$0xff]
  %v48 = vld [vmem:[%s1 + $0xe8] sm:$0xff]
  %v49 = vld [vmem:[%s1 + $0xf0] sm:$0xff]
  %v50 = vld [vmem:[%s1 + $0xf8] sm:$0xff]
  %v51 = vld [vmem:[%s1 + $0x100] sm:$0xff]
  %v52 = vld [vmem:[%s1 + $0x108] sm:$0xff]
  %v53 = vld [vmem:[%s1 + $0x110] sm:$0xff]
  %v54 = vld [vmem:[%s1 + $0x118] sm:$0xff]
  %v55 = vld [vmem:[%s1 + $0x120] sm:$0xff]
  %v56 = vld [vmem:[%s1 + $0x128] sm:$0xff]
  %v57 = vld [vmem:[%s1 + $0x130] sm:$0xff]
  %v58 = vld [vmem:[%s1 + $0x138] sm:$0xff]
  %v59 = vld [vmem:[%s1 + $0x140] sm:$0xff]
  %v60 = vld [vmem:[%s1 + $0x148] sm:$0xff]
  %v61 = vld [vmem:[%s1 + $0x150] sm:$0xff]
  %v62 = vld [vmem:[%s1 + $0x158] sm:$0xff]
  %v63 = vld [vmem:[%s1 + $0x160] sm:$0xff]
  %v64 = vld [vmem:[%s1 + $0x168] sm:$0xff]
  %v65 = vld [vmem:[%s1 + $0x170] sm:$0xff]
  %v66 = vld [vmem:[%s1 + $0x178] sm:$0xff]
  %v67 = vld [vmem:[%s1 + $0x180] sm:$0xff]
  %v68 = vld [vmem:[%s1 + $0x188] sm:$0xff]
  %v69 = vld [vmem:[%s1 + $0x190] sm:$0xff]
  %v70 = vld [vmem:[%s1 + $0x198] sm:$0xff]
  %v71 = vld [vmem:[%s1 + $0x1a0] sm:$0xff]
  %v72 = vld [vmem:[%s1 + $0x1a8] sm:$0xff]
  %v73 = vld [vmem:[%s1 + $0x1b0] sm:$0xff]
  %v74 = vld [vmem:[%s1 + $0x1b8] sm:$0xff]
  %v75 = vld [vmem:[%s1 + $0x1c0] sm:$0xff]
  %v76 = vld [vmem:[%s1 + $0x1c8] sm:$0xff]
  %v77 = vld [vmem:[%s1 + $0x1d0] sm:$0xff]
  %v78 = vld [vmem:[%s1 + $0x1d8] sm:$0xff]
  %v79 = vld [vmem:[%s1 + $0x1e0] sm:$0xff]
  %v80 = vld [vmem:[%s1 + $0x1e8] sm:$0xff]
  %v81 = vld [vmem:[%s1 + $0x1f0] sm:$0xff]
  %v82 = vld [vmem:[%s1 + $0x1f8] sm:$0xff]
  %s83 = sld [smem:[#allocation2]]
  %v84 = vstv %s83
  %85 = vmatprep.subr.mxu0 0.0
  %v86 = vand.u32 %v34, 4294901760
  %87 = vmatpush1.msra.mxu0 %v86
  %88 = vmatprep.subr.mxu0 0.0
  %v89 = vand.u32 %v33, 4294901760
  %90 = vmatpush1.msra.mxu0 %v89
  %91 = vmatprep.subr.mxu0 0.0
  %v92 = vand.u32 %v32, 4294901760
  %93 = vmatpush1.msra.mxu0 %v92
  %94 = vmatprep.subr.mxu0 0.0
  %v95 = vand.u32 %v31, 4294901760
  %96 = vmatpush1.msra.mxu0 %v95
  %97 = vmatprep.subr.mxu0 0.0
  %v98 = vand.u32 %v30, 4294901760
  %99 = vmatpush1.msra.mxu0 %v98
  %100 = vmatprep.subr.mxu0 0.0
  %v101 = vand.u32 %v29, 4294901760
  %102 = vmatpush1.msra.mxu0 %v101
  %103 = vmatprep.subr.mxu0 0.0
  %v104 = vand.u32 %v28, 4294901760
  %105 = vmatpush1.msra.mxu0 %v104
  %106 = vmatprep.subr.mxu0 0.0
  %v107 = vand.u32 %v27, 4294901760
  %108 = vmatpush1.msra.mxu0 %v107
  %109 = vmatprep.subr.mxu0 0.0
  %v110 = vand.u32 %v26, 4294901760
  %111 = vmatpush1.msra.mxu0 %v110
  %112 = vmatprep.subr.mxu0 0.0
  %v113 = vand.u32 %v25, 4294901760
  %114 = vmatpush1.msra.mxu0 %v113
  %115 = vmatprep.subr.mxu0 0.0
  %v116 = vand.u32 %v24, 4294901760
  %117 = vmatpush1.msra.mxu0 %v116
  %118 = vmatprep.subr.mxu0 0.0
  %v119 = vand.u32 %v23, 4294901760
  %120 = vmatpush1.msra.mxu0 %v119
  %121 = vmatprep.subr.mxu0 0.0
  %v122 = vand.u32 %v22, 4294901760
  %123 = vmatpush1.msra.mxu0 %v122
  %124 = vmatprep.subr.mxu0 0.0
  %v125 = vand.u32 %v21, 4294901760
  %126 = vmatpush1.msra.mxu0 %v125
  %127 = vmatprep.subr.mxu0 0.0
  %v128 = vand.u32 %v20, 4294901760
  %129 = vmatpush1.msra.mxu0 %v128
  %130 = vmatprep.subr.mxu0 0.0
  %v131 = vand.u32 %v19, 4294901760
  %132 = vmatpush1.msra.mxu0 %v131
  %133 = vmatprep.subr.mxu0 0.0
  %v134 = vand.u32 %v50, 4294901760
  %135 = vmatpush2.msra.mxu0 %v134
  %136 = vmatprep.subr.mxu0 0.0
  %v137 = vand.u32 %v49, 4294901760
  %138 = vmatpush2.msra.mxu0 %v137
  %139 = vmatprep.subr.mxu0 0.0
  %v140 = vand.u32 %v48, 4294901760
  %141 = vmatpush2.msra.mxu0 %v140
  %142 = vmatprep.subr.mxu0 0.0
  %v143 = vand.u32 %v47, 4294901760
  %144 = vmatpush2.msra.mxu0 %v143
  %145 = vmatprep.subr.mxu0 0.0
  %v146 = vand.u32 %v46, 4294901760
  %147 = vmatpush2.msra.mxu0 %v146
  %148 = vmatprep.subr.mxu0 0.0
  %v149 = vand.u32 %v45, 4294901760
  %150 = vmatpush2.msra.mxu0 %v149
  %151 = vmatprep.subr.mxu0 0.0
  %v152 = vand.u32 %v44, 4294901760
  %153 = vmatpush2.msra.mxu0 %v152
  %154 = vmatprep.subr.mxu0 0.0
  %v155 = vand.u32 %v43, 4294901760
  %156 = vmatpush2.msra.mxu0 %v155
  %157 = vmatprep.subr.mxu0 0.0
  %v158 = vand.u32 %v42, 4294901760
  %159 = vmatpush2.msra.mxu0 %v158
  %160 = vmatprep.subr.mxu0 0.0
  %v161 = vand.u32 %v41, 4294901760
  %162 = vmatpush2.msra.mxu0 %v161
  %163 = vmatprep.subr.mxu0 0.0
  %v164 = vand.u32 %v40, 4294901760
  %165 = vmatpush2.msra.mxu0 %v164
  %166 = vmatprep.subr.mxu0 0.0
  %v167 = vand.u32 %v39, 4294901760
  %168 = vmatpush2.msra.mxu0 %v167
  %169 = vmatprep.subr.mxu0 0.0
  %v170 = vand.u32 %v38, 4294901760
  %171 = vmatpush2.msra.mxu0 %v170
  %172 = vmatprep.subr.mxu0 0.0
  %v173 = vand.u32 %v37, 4294901760
  %174 = vmatpush2.msra.mxu0 %v173
  %175 = vmatprep.subr.mxu0 0.0
  %v176 = vand.u32 %v36, 4294901760
  %177 = vmatpush2.msra.mxu0 %v176
  %178 = vmatprep.subr.mxu0 0.0
  %v179 = vand.u32 %v35, 4294901760
  %180 = vmatpush2.msra.mxu0 %v179
  %v181 = vand.u32 %v16, 4294901760
  %v182 = vsub.f32 %v16, %v181
  %v183 = vand.u32 %v182, 4294901760
  %v184 = vsub.f32 %v182, %v183
  %v185 = vand.u32 %v184, 4294901760
  %186 = vmatprep.mubr.f32.mxu0 %v185
  %v187 = vand.u32 %v15, 4294901760
  %v188 = vsub.f32 %v15, %v187
  %v189 = vand.u32 %v188, 4294901760
  %v190 = vsub.f32 %v188, %v189
  %v191 = vand.u32 %v190, 4294901760
  %192 = vmatmul.mubr.f32.gmra.mxu0 %v191
  %v193 = vpop.f32.mrf.mxu0
  %v194 = vadd.f32 %v84, %v193
  %v195 = vpop.f32.mrf.mxu0
  %196 = vdwg.mxu0
  %197 = vmatprep.subr.mxu0 0.0
  %v198 = vand.u32 %v34, 4294901760
  %v199 = vsub.f32 %v34, %v198
  %v200 = vand.u32 %v199, 4294901760
  %v201 = vsub.f32 %v199, %v200
  %v202 = vand.u32 %v201, 4294901760
  %203 = vmatpush1.msra.mxu0 %v202
  %204 = vmatprep.subr.mxu0 0.0
  %v205 = vand.u32 %v33, 4294901760
  %v206 = vsub.f32 %v33, %v205
  %v207 = vand.u32 %v206, 4294901760
  %v208 = vsub.f32 %v206, %v207
  %v209 = vand.u32 %v208, 4294901760
  %210 = vmatpush1.msra.mxu0 %v209
  %211 = vmatprep.subr.mxu0 0.0
  %v212 = vand.u32 %v32, 4294901760
  %v213 = vsub.f32 %v32, %v212
  %v214 = vand.u32 %v213, 4294901760
  %v215 = vsub.f32 %v213, %v214
  %v216 = vand.u32 %v215, 4294901760
  %217 = vmatpush1.msra.mxu0 %v216
  %218 = vmatprep.subr.mxu0 0.0
  %v219 = vand.u32 %v31, 4294901760
  %v220 = vsub.f32 %v31, %v219
  %v221 = vand.u32 %v220, 4294901760
  %v222 = vsub.f32 %v220, %v221
  %v223 = vand.u32 %v222, 4294901760
  %224 = vmatpush1.msra.mxu0 %v223
  %225 = vmatprep.subr.mxu0 0.0
  %v226 = vand.u32 %v30, 4294901760
  %v227 = vsub.f32 %v30, %v226
  %v228 = vand.u32 %v227, 4294901760
  %v229 = vsub.f32 %v227, %v228
  %v230 = vand.u32 %v229, 4294901760
  %231 = vmatpush1.msra.mxu0 %v230
  %232 = vmatprep.subr.mxu0 0.0
  %v233 = vand.u32 %v29, 4294901760
  %v234 = vsub.f32 %v29, %v233
  %v235 = vand.u32 %v234, 4294901760
  %v236 = vsub.f32 %v234, %v235
  %v237 = vand.u32 %v236, 4294901760
  %238 = vmatpush1.msra.mxu0 %v237
  %239 = vmatprep.subr.mxu0 0.0
  %v240 = vand.u32 %v28, 4294901760
  %v241 = vsub.f32 %v28, %v240
  %v242 = vand.u32 %v241, 4294901760
  %v243 = vsub.f32 %v241, %v242
  %v244 = vand.u32 %v243, 4294901760
  %245 = vmatpush1.msra.mxu0 %v244
  %246 = vmatprep.subr.mxu0 0.0
  %v247 = vand.u32 %v27, 4294901760
  %v248 = vsub.f32 %v27, %v247
  %v249 = vand.u32 %v248, 4294901760
  %v250 = vsub.f32 %v248, %v249
  %v251 = vand.u32 %v250, 4294901760
  %252 = vmatpush1.msra.mxu0 %v251
  %253 = vmatprep.subr.mxu0 0.0
  %v254 = vand.u32 %v26, 4294901760
  %v255 = vsub.f32 %v26, %v254
  %v256 = vand.u32 %v255, 4294901760
  %v257 = vsub.f32 %v255, %v256
  %v258 = vand.u32 %v257, 4294901760
  %259 = vmatpush1.msra.mxu0 %v258
  %260 = vmatprep.subr.mxu0 0.0
  %v261 = vand.u32 %v25, 4294901760
  %v262 = vsub.f32 %v25, %v261
  %v263 = vand.u32 %v262, 4294901760
  %v264 = vsub.f32 %v262, %v263
  %v265 = vand.u32 %v264, 4294901760
  %266 = vmatpush1.msra.mxu0 %v265
  %267 = vmatprep.subr.mxu0 0.0
  %v268 = vand.u32 %v24, 4294901760
  %v269 = vsub.f32 %v24, %v268
  %v270 = vand.u32 %v269, 4294901760
  %v271 = vsub.f32 %v269, %v270
  %v272 = vand.u32 %v271, 4294901760
  %273 = vmatpush1.msra.mxu0 %v272
  %274 = vmatprep.subr.mxu0 0.0
  %v275 = vand.u32 %v23, 4294901760
  %v276 = vsub.f32 %v23, %v275
  %v277 = vand.u32 %v276, 4294901760
  %v278 = vsub.f32 %v276, %v277
  %v279 = vand.u32 %v278, 4294901760
  %280 = vmatpush1.msra.mxu0 %v279
  %281 = vmatprep.subr.mxu0 0.0
  %v282 = vand.u32 %v22, 4294901760
  %v283 = vsub.f32 %v22, %v282
  %v284 = vand.u32 %v283, 4294901760
  %v285 = vsub.f32 %v283, %v284
  %v286 = vand.u32 %v285, 4294901760
  %287 = vmatpush1.msra.mxu0 %v286
  %288 = vmatprep.subr.mxu0 0.0
  %v289 = vand.u32 %v21, 4294901760
  %v290 = vsub.f32 %v21, %v289
  %v291 = vand.u32 %v290, 4294901760
  %v292 = vsub.f32 %v290, %v291
  %v293 = vand.u32 %v292, 4294901760
  %294 = vmatpush1.msra.mxu0 %v293
  %295 = vmatprep.subr.mxu0 0.0
  %v296 = vand.u32 %v20, 4294901760
  %v297 = vsub.f32 %v20, %v296
  %v298 = vand.u32 %v297, 4294901760
  %v299 = vsub.f32 %v297, %v298
  %v300 = vand.u32 %v299, 4294901760
  %301 = vmatpush1.msra.mxu0 %v300
  %302 = vmatprep.subr.mxu0 0.0
  %v303 = vand.u32 %v19, 4294901760
  %v304 = vsub.f32 %v19, %v303
  %v305 = vand.u32 %v304, 4294901760
  %v306 = vsub.f32 %v304, %v305
  %v307 = vand.u32 %v306, 4294901760
  %308 = vmatpush1.msra.mxu0 %v307
  %309 = vmatprep.subr.mxu0 0.0
  %v310 = vand.u32 %v50, 4294901760
  %v311 = vsub.f32 %v50, %v310
  %v312 = vand.u32 %v311, 4294901760
  %v313 = vsub.f32 %v311, %v312
  %v314 = vand.u32 %v313, 4294901760
  %315 = vmatpush2.msra.mxu0 %v314
  %316 = vmatprep.subr.mxu0 0.0
  %v317 = vand.u32 %v49, 4294901760
  %v318 = vsub.f32 %v49, %v317
  %v319 = vand.u32 %v318, 4294901760
  %v320 = vsub.f32 %v318, %v319
  %v321 = vand.u32 %v320, 4294901760
  %322 = vmatpush2.msra.mxu0 %v321
  %323 = vmatprep.subr.mxu0 0.0
  %v324 = vand.u32 %v48, 4294901760
  %v325 = vsub.f32 %v48, %v324
  %v326 = vand.u32 %v325, 4294901760
  %v327 = vsub.f32 %v325, %v326
  %v328 = vand.u32 %v327, 4294901760
  %329 = vmatpush2.msra.mxu0 %v328
  %330 = vmatprep.subr.mxu0 0.0
  %v331 = vand.u32 %v47, 4294901760
  %v332 = vsub.f32 %v47, %v331
  %v333 = vand.u32 %v332, 4294901760
  %v334 = vsub.f32 %v332, %v333
  %v335 = vand.u32 %v334, 4294901760
  %336 = vmatpush2.msra.mxu0 %v335
  %337 = vmatprep.subr.mxu0 0.0
  %v338 = vand.u32 %v46, 4294901760
  %v339 = vsub.f32 %v46, %v338
  %v340 = vand.u32 %v339, 4294901760
  %v341 = vsub.f32 %v339, %v340
  %v342 = vand.u32 %v341, 4294901760
  %343 = vmatpush2.msra.mxu0 %v342
  %344 = vmatprep.subr.mxu0 0.0
  %v345 = vand.u32 %v45, 4294901760
  %v346 = vsub.f32 %v45, %v345
  %v347 = vand.u32 %v346, 4294901760
  %v348 = vsub.f32 %v346, %v347
  %v349 = vand.u32 %v348, 4294901760
  %350 = vmatpush2.msra.mxu0 %v349
  %351 = vmatprep.subr.mxu0 0.0
  %v352 = vand.u32 %v44, 4294901760
  %v353 = vsub.f32 %v44, %v352
  %v354 = vand.u32 %v353, 4294901760
  %v355 = vsub.f32 %v353, %v354
  %v356 = vand.u32 %v355, 4294901760
  %357 = vmatpush2.msra.mxu0 %v356
  %358 = vmatprep.subr.mxu0 0.0
  %v359 = vand.u32 %v43, 4294901760
  %v360 = vsub.f32 %v43, %v359
  %v361 = vand.u32 %v360, 4294901760
  %v362 = vsub.f32 %v360, %v361
  %v363 = vand.u32 %v362, 4294901760
  %364 = vmatpush2.msra.mxu0 %v363
  %365 = vmatprep.subr.mxu0 0.0
  %v366 = vand.u32 %v42, 4294901760
  %v367 = vsub.f32 %v42, %v366
  %v368 = vand.u32 %v367, 4294901760
  %v369 = vsub.f32 %v367, %v368
  %v370 = vand.u32 %v369, 4294901760
  %371 = vmatpush2.msra.mxu0 %v370
  %372 = vmatprep.subr.mxu0 0.0
  %v373 = vand.u32 %v41, 4294901760
  %v374 = vsub.f32 %v41, %v373
  %v375 = vand.u32 %v374, 4294901760
  %v376 = vsub.f32 %v374, %v375
  %v377 = vand.u32 %v376, 4294901760
  %378 = vmatpush2.msra.mxu0 %v377
  %379 = vmatprep.subr.mxu0 0.0
  %v380 = vand.u32 %v40, 4294901760
  %v381 = vsub.f32 %v40, %v380
  %v382 = vand.u32 %v381, 4294901760
  %v383 = vsub.f32 %v381, %v382
  %v384 = vand.u32 %v383, 4294901760
  %385 = vmatpush2.msra.mxu0 %v384
  %386 = vmatprep.subr.mxu0 0.0
  %v387 = vand.u32 %v39, 4294901760
  %v388 = vsub.f32 %v39, %v387
  %v389 = vand.u32 %v388, 4294901760
  %v390 = vsub.f32 %v388, %v389
  %v391 = vand.u32 %v390, 4294901760
  %392 = vmatpush2.msra.mxu0 %v391
  %393 = vmatprep.subr.mxu0 0.0
  %v394 = vand.u32 %v38, 4294901760
  %v395 = vsub.f32 %v38, %v394
  %v396 = vand.u32 %v395, 4294901760
  %v397 = vsub.f32 %v395, %v396
  %v398 = vand.u32 %v397, 4294901760
  %399 = vmatpush2.msra.mxu0 %v398
  %400 = vmatprep.subr.mxu0 0.0
  %v401 = vand.u32 %v37, 4294901760
  %v402 = vsub.f32 %v37, %v401
  %v403 = vand.u32 %v402, 4294901760
  %v404 = vsub.f32 %v402, %v403
  %v405 = vand.u32 %v404, 4294901760
  %406 = vmatpush2.msra.mxu0 %v405
  %407 = vmatprep.subr.mxu0 0.0
  %v408 = vand.u32 %v36, 4294901760
  %v409 = vsub.f32 %v36, %v408
  %v410 = vand.u32 %v409, 4294901760
  %v411 = vsub.f32 %v409, %v410
  %v412 = vand.u32 %v411, 4294901760
  %413 = vmatpush2.msra.mxu0 %v412
  %414 = vmatprep.subr.mxu0 0.0
  %v415 = vand.u32 %v35, 4294901760
  %v416 = vsub.f32 %v35, %v415
  %v417 = vand.u32 %v416, 4294901760
  %v418 = vsub.f32 %v416, %v417
  %v419 = vand.u32 %v418, 4294901760
  %420 = vmatpush2.msra.mxu0 %v419
  %v421 = vand.u32 %v16, 4294901760
  %422 = vmatprep.mubr.f32.mxu0 %v421
  %v423 = vand.u32 %v15, 4294901760
  %424 = vmatmul.mubr.f32.gmra.mxu0 %v423
  %v425 = vpop.f32.mrf.mxu0
  %v426 = vadd.f32 %v194, %v425
  %v427 = vpop.f32.mrf.mxu0
  %428 = vdwg.mxu0
  %429 = vmatprep.subr.mxu0 0.0
  %v430 = vand.u32 %v34, 4294901760
  %v431 = vsub.f32 %v34, %v430
  %432 = vmatpush1.msra.mxu0 %v431
  %433 = vmatprep.subr.mxu0 0.0
  %v434 = vand.u32 %v33, 4294901760
  %v435 = vsub.f32 %v33, %v434
  %436 = vmatpush1.msra.mxu0 %v435
  %437 = vmatprep.subr.mxu0 0.0
  %v438 = vand.u32 %v32, 4294901760
  %v439 = vsub.f32 %v32, %v438
  %440 = vmatpush1.msra.mxu0 %v439
  %441 = vmatprep.subr.mxu0 0.0
  %v442 = vand.u32 %v31, 4294901760
  %v443 = vsub.f32 %v31, %v442
  %444 = vmatpush1.msra.mxu0 %v443
  %445 = vmatprep.subr.mxu0 0.0
  %v446 = vand.u32 %v30, 4294901760
  %v447 = vsub.f32 %v30, %v446
  %448 = vmatpush1.msra.mxu0 %v447
  %449 = vmatprep.subr.mxu0 0.0
  %v450 = vand.u32 %v29, 4294901760
  %v451 = vsub.f32 %v29, %v450
  %452 = vmatpush1.msra.mxu0 %v451
  %453 = vmatprep.subr.mxu0 0.0
  %v454 = vand.u32 %v28, 4294901760
  %v455 = vsub.f32 %v28, %v454
  %456 = vmatpush1.msra.mxu0 %v455
  %457 = vmatprep.subr.mxu0 0.0
  %v458 = vand.u32 %v27, 4294901760
  %v459 = vsub.f32 %v27, %v458
  %460 = vmatpush1.msra.mxu0 %v459
  %461 = vmatprep.subr.mxu0 0.0
  %v462 = vand.u32 %v26, 4294901760
  %v463 = vsub.f32 %v26, %v462
  %464 = vmatpush1.msra.mxu0 %v463
  %465 = vmatprep.subr.mxu0 0.0
  %v466 = vand.u32 %v25, 4294901760
  %v467 = vsub.f32 %v25, %v466
  %468 = vmatpush1.msra.mxu0 %v467
  %469 = vmatprep.subr.mxu0 0.0
  %v470 = vand.u32 %v24, 4294901760
  %v471 = vsub.f32 %v24, %v470
  %472 = vmatpush1.msra.mxu0 %v471
  %473 = vmatprep.subr.mxu0 0.0
  %v474 = vand.u32 %v23, 4294901760
  %v475 = vsub.f32 %v23, %v474
  %476 = vmatpush1.msra.mxu0 %v475
  %477 = vmatprep.subr.mxu0 0.0
  %v478 = vand.u32 %v22, 4294901760
  %v479 = vsub.f32 %v22, %v478
  %480 = vmatpush1.msra.mxu0 %v479
  %481 = vmatprep.subr.mxu0 0.0
  %v482 = vand.u32 %v21, 4294901760
  %v483 = vsub.f32 %v21, %v482
  %484 = vmatpush1.msra.mxu0 %v483
  %485 = vmatprep.subr.mxu0 0.0
  %v486 = vand.u32 %v20, 4294901760
  %v487 = vsub.f32 %v20, %v486
  %488 = vmatpush1.msra.mxu0 %v487
  %489 = vmatprep.subr.mxu0 0.0
  %v490 = vand.u32 %v19, 4294901760
  %v491 = vsub.f32 %v19, %v490
  %492 = vmatpush1.msra.mxu0 %v491
  %493 = vmatprep.subr.mxu0 0.0
  %v494 = vand.u32 %v50, 4294901760
  %v495 = vsub.f32 %v50, %v494
  %496 = vmatpush2.msra.mxu0 %v495
  %497 = vmatprep.subr.mxu0 0.0
  %v498 = vand.u32 %v49, 4294901760
  %v499 = vsub.f32 %v49, %v498
  %500 = vmatpush2.msra.mxu0 %v499
  %501 = vmatprep.subr.mxu0 0.0
  %v502 = vand.u32 %v48, 4294901760
  %v503 = vsub.f32 %v48, %v502
  %504 = vmatpush2.msra.mxu0 %v503
  %505 = vmatprep.subr.mxu0 0.0
  %v506 = vand.u32 %v47, 4294901760
  %v507 = vsub.f32 %v47, %v506
  %508 = vmatpush2.msra.mxu0 %v507
  %509 = vmatprep.subr.mxu0 0.0
  %v510 = vand.u32 %v46, 4294901760
  %v511 = vsub.f32 %v46, %v510
  %512 = vmatpush2.msra.mxu0 %v511
  %513 = vmatprep.subr.mxu0 0.0
  %v514 = vand.u32 %v45, 4294901760
  %v515 = vsub.f32 %v45, %v514
  %516 = vmatpush2.msra.mxu0 %v515
  %517 = vmatprep.subr.mxu0 0.0
  %v518 = vand.u32 %v44, 4294901760
  %v519 = vsub.f32 %v44, %v518
  %520 = vmatpush2.msra.mxu0 %v519
  %521 = vmatprep.subr.mxu0 0.0
  %v522 = vand.u32 %v43, 4294901760
  %v523 = vsub.f32 %v43, %v522
  %524 = vmatpush2.msra.mxu0 %v523
  %525 = vmatprep.subr.mxu0 0.0
  %v526 = vand.u32 %v42, 4294901760
  %v527 = vsub.f32 %v42, %v526
  %528 = vmatpush2.msra.mxu0 %v527
  %529 = vmatprep.subr.mxu0 0.0
  %v530 = vand.u32 %v41, 4294901760
  %v531 = vsub.f32 %v41, %v530
  %532 = vmatpush2.msra.mxu0 %v531
  %533 = vmatprep.subr.mxu0 0.0
  %v534 = vand.u32 %v40, 4294901760
  %v535 = vsub.f32 %v40, %v534
  %536 = vmatpush2.msra.mxu0 %v535
  %537 = vmatprep.subr.mxu0 0.0
  %v538 = vand.u32 %v39, 4294901760
  %v539 = vsub.f32 %v39, %v538
  %540 = vmatpush2.msra.mxu0 %v539
  %541 = vmatprep.subr.mxu0 0.0
  %v542 = vand.u32 %v38, 4294901760
  %v543 = vsub.f32 %v38, %v542
  %544 = vmatpush2.msra.mxu0 %v543
  %545 = vmatprep.subr.mxu0 0.0
  %v546 = vand.u32 %v37, 4294901760
  %v547 = vsub.f32 %v37, %v546
  %548 = vmatpush2.msra.mxu0 %v547
  %549 = vmatprep.subr.mxu0 0.0
  %v550 = vand.u32 %v36, 4294901760
  %v551 = vsub.f32 %v36, %v550
  %552 = vmatpush2.msra.mxu0 %v551
  %553 = vmatprep.subr.mxu0 0.0
  %v554 = vand.u32 %v35, 4294901760
  %v555 = vsub.f32 %v35, %v554
  %556 = vmatpush2.msra.mxu0 %v555
  %v557 = vand.u32 %v16, 4294901760
  %v558 = vsub.f32 %v16, %v557
  %559 = vmatprep.mubr.f32.mxu0 %v558
  %v560 = vand.u32 %v15, 4294901760
  %v561 = vsub.f32 %v15, %v560
  %562 = vmatmul.mubr.f32.gmra.mxu0 %v561
  %v563 = vpop.f32.mrf.mxu0
  %v564 = vadd.f32 %v426, %v563
  %v565 = vpop.f32.mrf.mxu0
  %566 = vdwg.mxu0
  %567 = vmatprep.subr.mxu0 0.0
  %v568 = vand.u32 %v34, 4294901760
  %569 = vmatpush1.msra.mxu0 %v568
  %570 = vmatprep.subr.mxu0 0.0
  %v571 = vand.u32 %v33, 4294901760
  %572 = vmatpush1.msra.mxu0 %v571
  %573 = vmatprep.subr.mxu0 0.0
  %v574 = vand.u32 %v32, 4294901760
  %575 = vmatpush1.msra.mxu0 %v574
  %576 = vmatprep.subr.mxu0 0.0
  %v577 = vand.u32 %v31, 4294901760
  %578 = vmatpush1.msra.mxu0 %v577
  %579 = vmatprep.subr.mxu0 0.0
  %v580 = vand.u32 %v30, 4294901760
  %581 = vmatpush1.msra.mxu0 %v580
  %582 = vmatprep.subr.mxu0 0.0
  %v583 = vand.u32 %v29, 4294901760
  %584 = vmatpush1.msra.mxu0 %v583
  %585 = vmatprep.subr.mxu0 0.0
  %v586 = vand.u32 %v28, 4294901760
  %587 = vmatpush1.msra.mxu0 %v586
  %588 = vmatprep.subr.mxu0 0.0
  %v589 = vand.u32 %v27, 4294901760
  %590 = vmatpush1.msra.mxu0 %v589
  %591 = vmatprep.subr.mxu0 0.0
  %v592 = vand.u32 %v26, 4294901760
  %593 = vmatpush1.msra.mxu0 %v592
  %594 = vmatprep.subr.mxu0 0.0
  %v595 = vand.u32 %v25, 4294901760
  %596 = vmatpush1.msra.mxu0 %v595
  %597 = vmatprep.subr.mxu0 0.0
  %v598 = vand.u32 %v24, 4294901760
  %599 = vmatpush1.msra.mxu0 %v598
  %600 = vmatprep.subr.mxu0 0.0
  %v601 = vand.u32 %v23, 4294901760
  %602 = vmatpush1.msra.mxu0 %v601
  %603 = vmatprep.subr.mxu0 0.0
  %v604 = vand.u32 %v22, 4294901760
  %605 = vmatpush1.msra.mxu0 %v604
  %606 = vmatprep.subr.mxu0 0.0
  %v607 = vand.u32 %v21, 4294901760
  %608 = vmatpush1.msra.mxu0 %v607
  %609 = vmatprep.subr.mxu0 0.0
  %v610 = vand.u32 %v20, 4294901760
  %611 = vmatpush1.msra.mxu0 %v610
  %612 = vmatprep.subr.mxu0 0.0
  %v613 = vand.u32 %v19, 4294901760
  %614 = vmatpush1.msra.mxu0 %v613
  %615 = vmatprep.subr.mxu0 0.0
  %v616 = vand.u32 %v50, 4294901760
  %617 = vmatpush2.msra.mxu0 %v616
  %618 = vmatprep.subr.mxu0 0.0
  %v619 = vand.u32 %v49, 4294901760
  %620 = vmatpush2.msra.mxu0 %v619
  %621 = vmatprep.subr.mxu0 0.0
  %v622 = vand.u32 %v48, 4294901760
  %623 = vmatpush2.msra.mxu0 %v622
  %624 = vmatprep.subr.mxu0 0.0
  %v625 = vand.u32 %v47, 4294901760
  %626 = vmatpush2.msra.mxu0 %v625
  %627 = vmatprep.subr.mxu0 0.0
  %v628 = vand.u32 %v46, 4294901760
  %629 = vmatpush2.msra.mxu0 %v628
  %630 = vmatprep.subr.mxu0 0.0
  %v631 = vand.u32 %v45, 4294901760
  %632 = vmatpush2.msra.mxu0 %v631
  %633 = vmatprep.subr.mxu0 0.0
  %v634 = vand.u32 %v44, 4294901760
  %635 = vmatpush2.msra.mxu0 %v634
  %636 = vmatprep.subr.mxu0 0.0
  %v637 = vand.u32 %v43, 4294901760
  %638 = vmatpush2.msra.mxu0 %v637
  %639 = vmatprep.subr.mxu0 0.0
  %v640 = vand.u32 %v42, 4294901760
  %641 = vmatpush2.msra.mxu0 %v640
  %642 = vmatprep.subr.mxu0 0.0
  %v643 = vand.u32 %v41, 4294901760
  %644 = vmatpush2.msra.mxu0 %v643
  %645 = vmatprep.subr.mxu0 0.0
  %v646 = vand.u32 %v40, 4294901760
  %647 = vmatpush2.msra.mxu0 %v646
  %648 = vmatprep.subr.mxu0 0.0
  %v649 = vand.u32 %v39, 4294901760
  %650 = vmatpush2.msra.mxu0 %v649
  %651 = vmatprep.subr.mxu0 0.0
  %v652 = vand.u32 %v38, 4294901760
  %653 = vmatpush2.msra.mxu0 %v652
  %654 = vmatprep.subr.mxu0 0.0
  %v655 = vand.u32 %v37, 4294901760
  %656 = vmatpush2.msra.mxu0 %v655
  %657 = vmatprep.subr.mxu0 0.0
  %v658 = vand.u32 %v36, 4294901760
  %659 = vmatpush2.msra.mxu0 %v658
  %660 = vmatprep.subr.mxu0 0.0
  %v661 = vand.u32 %v35, 4294901760
  %662 = vmatpush2.msra.mxu0 %v661
  %v663 = vand.u32 %v16, 4294901760
  %v664 = vsub.f32 %v16, %v663
  %v665 = vand.u32 %v664, 4294901760
  %666 = vmatprep.mubr.f32.mxu0 %v665
  %v667 = vand.u32 %v15, 4294901760
  %v668 = vsub.f32 %v15, %v667
  %v669 = vand.u32 %v668, 4294901760
  %670 = vmatmul.mubr.f32.gmra.mxu0 %v669
  %v671 = vpop.f32.mrf.mxu0
  %v672 = vadd.f32 %v564, %v671
  %v673 = vpop.f32.mrf.mxu0
  %674 = vdwg.mxu0
  %675 = vmatprep.subr.mxu0 0.0
  %v676 = vand.u32 %v34, 4294901760
  %v677 = vsub.f32 %v34, %v676
  %v678 = vand.u32 %v677, 4294901760
  %679 = vmatpush1.msra.mxu0 %v678
  %680 = vmatprep.subr.mxu0 0.0
  %v681 = vand.u32 %v33, 4294901760
  %v682 = vsub.f32 %v33, %v681
  %v683 = vand.u32 %v682, 4294901760
  %684 = vmatpush1.msra.mxu0 %v683
  %685 = vmatprep.subr.mxu0 0.0
  %v686 = vand.u32 %v32, 4294901760
  %v687 = vsub.f32 %v32, %v686
  %v688 = vand.u32 %v687, 4294901760
  %689 = vmatpush1.msra.mxu0 %v688
  %690 = vmatprep.subr.mxu0 0.0
  %v691 = vand.u32 %v31, 4294901760
  %v692 = vsub.f32 %v31, %v691
  %v693 = vand.u32 %v692, 4294901760
  %694 = vmatpush1.msra.mxu0 %v693
  %695 = vmatprep.subr.mxu0 0.0
  %v696 = vand.u32 %v30, 4294901760
  %v697 = vsub.f32 %v30, %v696
  %v698 = vand.u32 %v697, 4294901760
  %699 = vmatpush1.msra.mxu0 %v698
  %700 = vmatprep.subr.mxu0 0.0
  %v701 = vand.u32 %v29, 4294901760
  %v702 = vsub.f32 %v29, %v701
  %v703 = vand.u32 %v702, 4294901760
  %704 = vmatpush1.msra.mxu0 %v703
  %705 = vmatprep.subr.mxu0 0.0
  %v706 = vand.u32 %v28, 4294901760
  %v707 = vsub.f32 %v28, %v706
  %v708 = vand.u32 %v707, 4294901760
  %709 = vmatpush1.msra.mxu0 %v708
  %710 = vmatprep.subr.mxu0 0.0
  %v711 = vand.u32 %v27, 4294901760
  %v712 = vsub.f32 %v27, %v711
  %v713 = vand.u32 %v712, 4294901760
  %714 = vmatpush1.msra.mxu0 %v713
  %715 = vmatprep.subr.mxu0 0.0
  %v716 = vand.u32 %v26, 4294901760
  %v717 = vsub.f32 %v26, %v716
  %v718 = vand.u32 %v717, 4294901760
  %719 = vmatpush1.msra.mxu0 %v718
  %720 = vmatprep.subr.mxu0 0.0
  %v721 = vand.u32 %v25, 4294901760
  %v722 = vsub.f32 %v25, %v721
  %v723 = vand.u32 %v722, 4294901760
  %724 = vmatpush1.msra.mxu0 %v723
  %725 = vmatprep.subr.mxu0 0.0
  %v726 = vand.u32 %v24, 4294901760
  %v727 = vsub.f32 %v24, %v726
  %v728 = vand.u32 %v727, 4294901760
  %729 = vmatpush1.msra.mxu0 %v728
  %730 = vmatprep.subr.mxu0 0.0
  %v731 = vand.u32 %v23, 4294901760
  %v732 = vsub.f32 %v23, %v731
  %v733 = vand.u32 %v732, 4294901760
  %734 = vmatpush1.msra.mxu0 %v733
  %735 = vmatprep.subr.mxu0 0.0
  %v736 = vand.u32 %v22, 4294901760
  %v737 = vsub.f32 %v22, %v736
  %v738 = vand.u32 %v737, 4294901760
  %739 = vmatpush1.msra.mxu0 %v738
  %740 = vmatprep.subr.mxu0 0.0
  %v741 = vand.u32 %v21, 4294901760
  %v742 = vsub.f32 %v21, %v741
  %v743 = vand.u32 %v742, 4294901760
  %744 = vmatpush1.msra.mxu0 %v743
  %745 = vmatprep.subr.mxu0 0.0
  %v746 = vand.u32 %v20, 4294901760
  %v747 = vsub.f32 %v20, %v746
  %v748 = vand.u32 %v747, 4294901760
  %749 = vmatpush1.msra.mxu0 %v748
  %750 = vmatprep.subr.mxu0 0.0
  %v751 = vand.u32 %v19, 4294901760
  %v752 = vsub.f32 %v19, %v751
  %v753 = vand.u32 %v752, 4294901760
  %754 = vmatpush1.msra.mxu0 %v753
  %755 = vmatprep.subr.mxu0 0.0
  %v756 = vand.u32 %v50, 4294901760
  %v757 = vsub.f32 %v50, %v756
  %v758 = vand.u32 %v757, 4294901760
  %759 = vmatpush2.msra.mxu0 %v758
  %760 = vmatprep.subr.mxu0 0.0
  %v761 = vand.u32 %v49, 4294901760
  %v762 = vsub.f32 %v49, %v761
  %v763 = vand.u32 %v762, 4294901760
  %764 = vmatpush2.msra.mxu0 %v763
  %765 = vmatprep.subr.mxu0 0.0
  %v766 = vand.u32 %v48, 4294901760
  %v767 = vsub.f32 %v48, %v766
  %v768 = vand.u32 %v767, 4294901760
  %769 = vmatpush2.msra.mxu0 %v768
  %770 = vmatprep.subr.mxu0 0.0
  %v771 = vand.u32 %v47, 4294901760
  %v772 = vsub.f32 %v47, %v771
  %v773 = vand.u32 %v772, 4294901760
  %774 = vmatpush2.msra.mxu0 %v773
  %775 = vmatprep.subr.mxu0 0.0
  %v776 = vand.u32 %v46, 4294901760
  %v777 = vsub.f32 %v46, %v776
  %v778 = vand.u32 %v777, 4294901760
  %779 = vmatpush2.msra.mxu0 %v778
  %780 = vmatprep.subr.mxu0 0.0
  %v781 = vand.u32 %v45, 4294901760
  %v782 = vsub.f32 %v45, %v781
  %v783 = vand.u32 %v782, 4294901760
  %784 = vmatpush2.msra.mxu0 %v783
  %785 = vmatprep.subr.mxu0 0.0
  %v786 = vand.u32 %v44, 4294901760
  %v787 = vsub.f32 %v44, %v786
  %v788 = vand.u32 %v787, 4294901760
  %789 = vmatpush2.msra.mxu0 %v788
  %790 = vmatprep.subr.mxu0 0.0
  %v791 = vand.u32 %v43, 4294901760
  %v792 = vsub.f32 %v43, %v791
  %v793 = vand.u32 %v792, 4294901760
  %794 = vmatpush2.msra.mxu0 %v793
  %795 = vmatprep.subr.mxu0 0.0
  %v796 = vand.u32 %v42, 4294901760
  %v797 = vsub.f32 %v42, %v796
  %v798 = vand.u32 %v797, 4294901760
  %799 = vmatpush2.msra.mxu0 %v798
  %800 = vmatprep.subr.mxu0 0.0
  %v801 = vand.u32 %v41, 4294901760
  %v802 = vsub.f32 %v41, %v801
  %v803 = vand.u32 %v802, 4294901760
  %804 = vmatpush2.msra.mxu0 %v803
  %805 = vmatprep.subr.mxu0 0.0
  %v806 = vand.u32 %v40, 4294901760
  %v807 = vsub.f32 %v40, %v806
  %v808 = vand.u32 %v807, 4294901760
  %809 = vmatpush2.msra.mxu0 %v808
  %810 = vmatprep.subr.mxu0 0.0
  %v811 = vand.u32 %v39, 4294901760
  %v812 = vsub.f32 %v39, %v811
  %v813 = vand.u32 %v812, 4294901760
  %814 = vmatpush2.msra.mxu0 %v813
  %815 = vmatprep.subr.mxu0 0.0
  %v816 = vand.u32 %v38, 4294901760
  %v817 = vsub.f32 %v38, %v816
  %v818 = vand.u32 %v817, 4294901760
  %819 = vmatpush2.msra.mxu0 %v818
  %820 = vmatprep.subr.mxu0 0.0
  %v821 = vand.u32 %v37, 4294901760
  %v822 = vsub.f32 %v37, %v821
  %v823 = vand.u32 %v822, 4294901760
  %824 = vmatpush2.msra.mxu0 %v823
  %825 = vmatprep.subr.mxu0 0.0
  %v826 = vand.u32 %v36, 4294901760
  %v827 = vsub.f32 %v36, %v826
  %v828 = vand.u32 %v827, 4294901760
  %829 = vmatpush2.msra.mxu0 %v828
  %830 = vmatprep.subr.mxu0 0.0
  %v831 = vand.u32 %v35, 4294901760
  %v832 = vsub.f32 %v35, %v831
  %v833 = vand.u32 %v832, 4294901760
  %834 = vmatpush2.msra.mxu0 %v833
  %v835 = vand.u32 %v16, 4294901760
  %836 = vmatprep.mubr.f32.mxu0 %v835
  %v837 = vand.u32 %v15, 4294901760
  %838 = vmatmul.mubr.f32.gmra.mxu0 %v837
  %v839 = vpop.f32.mrf.mxu0
  %v840 = vadd.f32 %v672, %v839
  %v841 = vpop.f32.mrf.mxu0
  %842 = vdwg.mxu0
  %843 = vmatprep.subr.mxu0 0.0
  %v844 = vand.u32 %v34, 4294901760
  %845 = vmatpush1.msra.mxu0 %v844
  %846 = vmatprep.subr.mxu0 0.0
  %v847 = vand.u32 %v33, 4294901760
  %848 = vmatpush1.msra.mxu0 %v847
  %849 = vmatprep.subr.mxu0 0.0
  %v850 = vand.u32 %v32, 4294901760
  %851 = vmatpush1.msra.mxu0 %v850
  %852 = vmatprep.subr.mxu0 0.0
  %v853 = vand.u32 %v31, 4294901760
  %854 = vmatpush1.msra.mxu0 %v853
  %855 = vmatprep.subr.mxu0 0.0
  %v856 = vand.u32 %v30, 4294901760
  %857 = vmatpush1.msra.mxu0 %v856
  %858 = vmatprep.subr.mxu0 0.0
  %v859 = vand.u32 %v29, 4294901760
  %860 = vmatpush1.msra.mxu0 %v859
  %861 = vmatprep.subr.mxu0 0.0
  %v862 = vand.u32 %v28, 4294901760
  %863 = vmatpush1.msra.mxu0 %v862
  %864 = vmatprep.subr.mxu0 0.0
  %v865 = vand.u32 %v27, 4294901760
  %866 = vmatpush1.msra.mxu0 %v865
  %867 = vmatprep.subr.mxu0 0.0
  %v868 = vand.u32 %v26, 4294901760
  %869 = vmatpush1.msra.mxu0 %v868
  %870 = vmatprep.subr.mxu0 0.0
  %v871 = vand.u32 %v25, 4294901760
  %872 = vmatpush1.msra.mxu0 %v871
  %873 = vmatprep.subr.mxu0 0.0
  %v874 = vand.u32 %v24, 4294901760
  %875 = vmatpush1.msra.mxu0 %v874
  %876 = vmatprep.subr.mxu0 0.0
  %v877 = vand.u32 %v23, 4294901760
  %878 = vmatpush1.msra.mxu0 %v877
  %879 = vmatprep.subr.mxu0 0.0
  %v880 = vand.u32 %v22, 4294901760
  %881 = vmatpush1.msra.mxu0 %v880
  %882 = vmatprep.subr.mxu0 0.0
  %v883 = vand.u32 %v21, 4294901760
  %884 = vmatpush1.msra.mxu0 %v883
  %885 = vmatprep.subr.mxu0 0.0
  %v886 = vand.u32 %v20, 4294901760
  %887 = vmatpush1.msra.mxu0 %v886
  %888 = vmatprep.subr.mxu0 0.0
  %v889 = vand.u32 %v19, 4294901760
  %890 = vmatpush1.msra.mxu0 %v889
  %891 = vmatprep.subr.mxu0 0.0
  %v892 = vand.u32 %v50, 4294901760
  %893 = vmatpush2.msra.mxu0 %v892
  %894 = vmatprep.subr.mxu0 0.0
  %v895 = vand.u32 %v49, 4294901760
  %896 = vmatpush2.msra.mxu0 %v895
  %897 = vmatprep.subr.mxu0 0.0
  %v898 = vand.u32 %v48, 4294901760
  %899 = vmatpush2.msra.mxu0 %v898
  %900 = vmatprep.subr.mxu0 0.0
  %v901 = vand.u32 %v47, 4294901760
  %902 = vmatpush2.msra.mxu0 %v901
  %903 = vmatprep.subr.mxu0 0.0
  %v904 = vand.u32 %v46, 4294901760
  %905 = vmatpush2.msra.mxu0 %v904
  %906 = vmatprep.subr.mxu0 0.0
  %v907 = vand.u32 %v45, 4294901760
  %908 = vmatpush2.msra.mxu0 %v907
  %909 = vmatprep.subr.mxu0 0.0
  %v910 = vand.u32 %v44, 4294901760
  %911 = vmatpush2.msra.mxu0 %v910
  %912 = vmatprep.subr.mxu0 0.0
  %v913 = vand.u32 %v43, 4294901760
  %914 = vmatpush2.msra.mxu0 %v913
  %915 = vmatprep.subr.mxu0 0.0
  %v916 = vand.u32 %v42, 4294901760
  %917 = vmatpush2.msra.mxu0 %v916
  %918 = vmatprep.subr.mxu0 0.0
  %v919 = vand.u32 %v41, 4294901760
  %920 = vmatpush2.msra.mxu0 %v919
  %921 = vmatprep.subr.mxu0 0.0
  %v922 = vand.u32 %v40, 4294901760
  %923 = vmatpush2.msra.mxu0 %v922
  %924 = vmatprep.subr.mxu0 0.0
  %v925 = vand.u32 %v39, 4294901760
  %926 = vmatpush2.msra.mxu0 %v925
  %927 = vmatprep.subr.mxu0 0.0
  %v928 = vand.u32 %v38, 4294901760
  %929 = vmatpush2.msra.mxu0 %v928
  %930 = vmatprep.subr.mxu0 0.0
  %v931 = vand.u32 %v37, 4294901760
  %932 = vmatpush2.msra.mxu0 %v931
  %933 = vmatprep.subr.mxu0 0.0
  %v934 = vand.u32 %v36, 4294901760
  %935 = vmatpush2.msra.mxu0 %v934
  %936 = vmatprep.subr.mxu0 0.0
  %v937 = vand.u32 %v35, 4294901760
  %938 = vmatpush2.msra.mxu0 %v937
  %v939 = vand.u32 %v16, 4294901760
  %940 = vmatprep.mubr.f32.mxu0 %v939
  %v941 = vand.u32 %v15, 4294901760
  %942 = vmatmul.mubr.f32.gmra.mxu0 %v941
  %v943 = vpop.f32.mrf.mxu0
  %v944 = vadd.f32 %v840, %v943
  %v945 = vpop.f32.mrf.mxu0
  %946 = vdwg.mxu0
  %947 = vmatprep.subr.mxu0 0.0
  %v948 = vand.u32 %v66, 4294901760
  %949 = vmatpush1.msra.mxu0 %v948
  %950 = vmatprep.subr.mxu0 0.0
  %v951 = vand.u32 %v65, 4294901760
  %952 = vmatpush1.msra.mxu0 %v951
  %953 = vmatprep.subr.mxu0 0.0
  %v954 = vand.u32 %v64, 4294901760
  %955 = vmatpush1.msra.mxu0 %v954
  %956 = vmatprep.subr.mxu0 0.0
  %v957 = vand.u32 %v63, 4294901760
  %958 = vmatpush1.msra.mxu0 %v957
  %959 = vmatprep.subr.mxu0 0.0
  %v960 = vand.u32 %v62, 4294901760
  %961 = vmatpush1.msra.mxu0 %v960
  %962 = vmatprep.subr.mxu0 0.0
  %v963 = vand.u32 %v61, 4294901760
  %964 = vmatpush1.msra.mxu0 %v963
  %965 = vmatprep.subr.mxu0 0.0
  %v966 = vand.u32 %v60, 4294901760
  %967 = vmatpush1.msra.mxu0 %v966
  %968 = vmatprep.subr.mxu0 0.0
  %v969 = vand.u32 %v59, 4294901760
  %970 = vmatpush1.msra.mxu0 %v969
  %971 = vmatprep.subr.mxu0 0.0
  %v972 = vand.u32 %v58, 4294901760
  %973 = vmatpush1.msra.mxu0 %v972
  %974 = vmatprep.subr.mxu0 0.0
  %v975 = vand.u32 %v57, 4294901760
  %976 = vmatpush1.msra.mxu0 %v975
  %977 = vmatprep.subr.mxu0 0.0
  %v978 = vand.u32 %v56, 4294901760
  %979 = vmatpush1.msra.mxu0 %v978
  %980 = vmatprep.subr.mxu0 0.0
  %v981 = vand.u32 %v55, 4294901760
  %982 = vmatpush1.msra.mxu0 %v981
  %983 = vmatprep.subr.mxu0 0.0
  %v984 = vand.u32 %v54, 4294901760
  %985 = vmatpush1.msra.mxu0 %v984
  %986 = vmatprep.subr.mxu0 0.0
  %v987 = vand.u32 %v53, 4294901760
  %988 = vmatpush1.msra.mxu0 %v987
  %989 = vmatprep.subr.mxu0 0.0
  %v990 = vand.u32 %v52, 4294901760
  %991 = vmatpush1.msra.mxu0 %v990
  %992 = vmatprep.subr.mxu0 0.0
  %v993 = vand.u32 %v51, 4294901760
  %994 = vmatpush1.msra.mxu0 %v993
  %995 = vmatprep.subr.mxu0 0.0
  %v996 = vand.u32 %v82, 4294901760
  %997 = vmatpush2.msra.mxu0 %v996
  %998 = vmatprep.subr.mxu0 0.0
  %v999 = vand.u32 %v81, 4294901760
  %1000 = vmatpush2.msra.mxu0 %v999
  %1001 = vmatprep.subr.mxu0 0.0
  %v1002 = vand.u32 %v80, 4294901760
  %1003 = vmatpush2.msra.mxu0 %v1002
  %1004 = vmatprep.subr.mxu0 0.0
  %v1005 = vand.u32 %v79, 4294901760
  %1006 = vmatpush2.msra.mxu0 %v1005
  %1007 = vmatprep.subr.mxu0 0.0
  %v1008 = vand.u32 %v78, 4294901760
  %1009 = vmatpush2.msra.mxu0 %v1008
  %1010 = vmatprep.subr.mxu0 0.0
  %v1011 = vand.u32 %v77, 4294901760
  %1012 = vmatpush2.msra.mxu0 %v1011
  %1013 = vmatprep.subr.mxu0 0.0
  %v1014 = vand.u32 %v76, 4294901760
  %1015 = vmatpush2.msra.mxu0 %v1014
  %1016 = vmatprep.subr.mxu0 0.0
  %v1017 = vand.u32 %v75, 4294901760
  %1018 = vmatpush2.msra.mxu0 %v1017
  %1019 = vmatprep.subr.mxu0 0.0
  %v1020 = vand.u32 %v74, 4294901760
  %1021 = vmatpush2.msra.mxu0 %v1020
  %1022 = vmatprep.subr.mxu0 0.0
  %v1023 = vand.u32 %v73, 4294901760
  %1024 = vmatpush2.msra.mxu0 %v1023
  %1025 = vmatprep.subr.mxu0 0.0
  %v1026 = vand.u32 %v72, 4294901760
  %1027 = vmatpush2.msra.mxu0 %v1026
  %1028 = vmatprep.subr.mxu0 0.0
  %v1029 = vand.u32 %v71, 4294901760
  %1030 = vmatpush2.msra.mxu0 %v1029
  %1031 = vmatprep.subr.mxu0 0.0
  %v1032 = vand.u32 %v70, 4294901760
  %1033 = vmatpush2.msra.mxu0 %v1032
  %1034 = vmatprep.subr.mxu0 0.0
  %v1035 = vand.u32 %v69, 4294901760
  %1036 = vmatpush2.msra.mxu0 %v1035
  %1037 = vmatprep.subr.mxu0 0.0
  %v1038 = vand.u32 %v68, 4294901760
  %1039 = vmatpush2.msra.mxu0 %v1038
  %1040 = vmatprep.subr.mxu0 0.0
  %v1041 = vand.u32 %v67, 4294901760
  %1042 = vmatpush2.msra.mxu0 %v1041
  %v1043 = vand.u32 %v18, 4294901760
  %v1044 = vsub.f32 %v18, %v1043
  %v1045 = vand.u32 %v1044, 4294901760
  %v1046 = vsub.f32 %v1044, %v1045
  %v1047 = vand.u32 %v1046, 4294901760
  %1048 = vmatprep.mubr.f32.mxu0 %v1047
  %v1049 = vand.u32 %v17, 4294901760
  %v1050 = vsub.f32 %v17, %v1049
  %v1051 = vand.u32 %v1050, 4294901760
  %v1052 = vsub.f32 %v1050, %v1051
  %v1053 = vand.u32 %v1052, 4294901760
  %1054 = vmatmul.mubr.f32.gmra.mxu0 %v1053
  %v1055 = vpop.f32.mrf.mxu0
  %v1056 = vadd.f32 %v944, %v1055
  %v1057 = vpop.f32.mrf.mxu0
  %1058 = vdwg.mxu0
  %1059 = vmatprep.subr.mxu0 0.0
  %v1060 = vand.u32 %v66, 4294901760
  %v1061 = vsub.f32 %v66, %v1060
  %v1062 = vand.u32 %v1061, 4294901760
  %v1063 = vsub.f32 %v1061, %v1062
  %v1064 = vand.u32 %v1063, 4294901760
  %1065 = vmatpush1.msra.mxu0 %v1064
  %1066 = vmatprep.subr.mxu0 0.0
  %v1067 = vand.u32 %v65, 4294901760
  %v1068 = vsub.f32 %v65, %v1067
  %v1069 = vand.u32 %v1068, 4294901760
  %v1070 = vsub.f32 %v1068, %v1069
  %v1071 = vand.u32 %v1070, 4294901760
  %1072 = vmatpush1.msra.mxu0 %v1071
  %1073 = vmatprep.subr.mxu0 0.0
  %v1074 = vand.u32 %v64, 4294901760
  %v1075 = vsub.f32 %v64, %v1074
  %v1076 = vand.u32 %v1075, 4294901760
  %v1077 = vsub.f32 %v1075, %v1076
  %v1078 = vand.u32 %v1077, 4294901760
  %1079 = vmatpush1.msra.mxu0 %v1078
  %1080 = vmatprep.subr.mxu0 0.0
  %v1081 = vand.u32 %v63, 4294901760
  %v1082 = vsub.f32 %v63, %v1081
  %v1083 = vand.u32 %v1082, 4294901760
  %v1084 = vsub.f32 %v1082, %v1083
  %v1085 = vand.u32 %v1084, 4294901760
  %1086 = vmatpush1.msra.mxu0 %v1085
  %1087 = vmatprep.subr.mxu0 0.0
  %v1088 = vand.u32 %v62, 4294901760
  %v1089 = vsub.f32 %v62, %v1088
  %v1090 = vand.u32 %v1089, 4294901760
  %v1091 = vsub.f32 %v1089, %v1090
  %v1092 = vand.u32 %v1091, 4294901760
  %1093 = vmatpush1.msra.mxu0 %v1092
  %1094 = vmatprep.subr.mxu0 0.0
  %v1095 = vand.u32 %v61, 4294901760
  %v1096 = vsub.f32 %v61, %v1095
  %v1097 = vand.u32 %v1096, 4294901760
  %v1098 = vsub.f32 %v1096, %v1097
  %v1099 = vand.u32 %v1098, 4294901760
  %1100 = vmatpush1.msra.mxu0 %v1099
  %1101 = vmatprep.subr.mxu0 0.0
  %v1102 = vand.u32 %v60, 4294901760
  %v1103 = vsub.f32 %v60, %v1102
  %v1104 = vand.u32 %v1103, 4294901760
  %v1105 = vsub.f32 %v1103, %v1104
  %v1106 = vand.u32 %v1105, 4294901760
  %1107 = vmatpush1.msra.mxu0 %v1106
  %1108 = vmatprep.subr.mxu0 0.0
  %v1109 = vand.u32 %v59, 4294901760
  %v1110 = vsub.f32 %v59, %v1109
  %v1111 = vand.u32 %v1110, 4294901760
  %v1112 = vsub.f32 %v1110, %v1111
  %v1113 = vand.u32 %v1112, 4294901760
  %1114 = vmatpush1.msra.mxu0 %v1113
  %1115 = vmatprep.subr.mxu0 0.0
  %v1116 = vand.u32 %v58, 4294901760
  %v1117 = vsub.f32 %v58, %v1116
  %v1118 = vand.u32 %v1117, 4294901760
  %v1119 = vsub.f32 %v1117, %v1118
  %v1120 = vand.u32 %v1119, 4294901760
  %1121 = vmatpush1.msra.mxu0 %v1120
  %1122 = vmatprep.subr.mxu0 0.0
  %v1123 = vand.u32 %v57, 4294901760
  %v1124 = vsub.f32 %v57, %v1123
  %v1125 = vand.u32 %v1124, 4294901760
  %v1126 = vsub.f32 %v1124, %v1125
  %v1127 = vand.u32 %v1126, 4294901760
  %1128 = vmatpush1.msra.mxu0 %v1127
  %1129 = vmatprep.subr.mxu0 0.0
  %v1130 = vand.u32 %v56, 4294901760
  %v1131 = vsub.f32 %v56, %v1130
  %v1132 = vand.u32 %v1131, 4294901760
  %v1133 = vsub.f32 %v1131, %v1132
  %v1134 = vand.u32 %v1133, 4294901760
  %1135 = vmatpush1.msra.mxu0 %v1134
  %1136 = vmatprep.subr.mxu0 0.0
  %v1137 = vand.u32 %v55, 4294901760
  %v1138 = vsub.f32 %v55, %v1137
  %v1139 = vand.u32 %v1138, 4294901760
  %v1140 = vsub.f32 %v1138, %v1139
  %v1141 = vand.u32 %v1140, 4294901760
  %1142 = vmatpush1.msra.mxu0 %v1141
  %1143 = vmatprep.subr.mxu0 0.0
  %v1144 = vand.u32 %v54, 4294901760
  %v1145 = vsub.f32 %v54, %v1144
  %v1146 = vand.u32 %v1145, 4294901760
  %v1147 = vsub.f32 %v1145, %v1146
  %v1148 = vand.u32 %v1147, 4294901760
  %1149 = vmatpush1.msra.mxu0 %v1148
  %1150 = vmatprep.subr.mxu0 0.0
  %v1151 = vand.u32 %v53, 4294901760
  %v1152 = vsub.f32 %v53, %v1151
  %v1153 = vand.u32 %v1152, 4294901760
  %v1154 = vsub.f32 %v1152, %v1153
  %v1155 = vand.u32 %v1154, 4294901760
  %1156 = vmatpush1.msra.mxu0 %v1155
  %1157 = vmatprep.subr.mxu0 0.0
  %v1158 = vand.u32 %v52, 4294901760
  %v1159 = vsub.f32 %v52, %v1158
  %v1160 = vand.u32 %v1159, 4294901760
  %v1161 = vsub.f32 %v1159, %v1160
  %v1162 = vand.u32 %v1161, 4294901760
  %1163 = vmatpush1.msra.mxu0 %v1162
  %1164 = vmatprep.subr.mxu0 0.0
  %v1165 = vand.u32 %v51, 4294901760
  %v1166 = vsub.f32 %v51, %v1165
  %v1167 = vand.u32 %v1166, 4294901760
  %v1168 = vsub.f32 %v1166, %v1167
  %v1169 = vand.u32 %v1168, 4294901760
  %1170 = vmatpush1.msra.mxu0 %v1169
  %1171 = vmatprep.subr.mxu0 0.0
  %v1172 = vand.u32 %v82, 4294901760
  %v1173 = vsub.f32 %v82, %v1172
  %v1174 = vand.u32 %v1173, 4294901760
  %v1175 = vsub.f32 %v1173, %v1174
  %v1176 = vand.u32 %v1175, 4294901760
  %1177 = vmatpush2.msra.mxu0 %v1176
  %1178 = vmatprep.subr.mxu0 0.0
  %v1179 = vand.u32 %v81, 4294901760
  %v1180 = vsub.f32 %v81, %v1179
  %v1181 = vand.u32 %v1180, 4294901760
  %v1182 = vsub.f32 %v1180, %v1181
  %v1183 = vand.u32 %v1182, 4294901760
  %1184 = vmatpush2.msra.mxu0 %v1183
  %1185 = vmatprep.subr.mxu0 0.0
  %v1186 = vand.u32 %v80, 4294901760
  %v1187 = vsub.f32 %v80, %v1186
  %v1188 = vand.u32 %v1187, 4294901760
  %v1189 = vsub.f32 %v1187, %v1188
  %v1190 = vand.u32 %v1189, 4294901760
  %1191 = vmatpush2.msra.mxu0 %v1190
  %1192 = vmatprep.subr.mxu0 0.0
  %v1193 = vand.u32 %v79, 4294901760
  %v1194 = vsub.f32 %v79, %v1193
  %v1195 = vand.u32 %v1194, 4294901760
  %v1196 = vsub.f32 %v1194, %v1195
  %v1197 = vand.u32 %v1196, 4294901760
  %1198 = vmatpush2.msra.mxu0 %v1197
  %1199 = vmatprep.subr.mxu0 0.0
  %v1200 = vand.u32 %v78, 4294901760
  %v1201 = vsub.f32 %v78, %v1200
  %v1202 = vand.u32 %v1201, 4294901760
  %v1203 = vsub.f32 %v1201, %v1202
  %v1204 = vand.u32 %v1203, 4294901760
  %1205 = vmatpush2.msra.mxu0 %v1204
  %1206 = vmatprep.subr.mxu0 0.0
  %v1207 = vand.u32 %v77, 4294901760
  %v1208 = vsub.f32 %v77, %v1207
  %v1209 = vand.u32 %v1208, 4294901760
  %v1210 = vsub.f32 %v1208, %v1209
  %v1211 = vand.u32 %v1210, 4294901760
  %1212 = vmatpush2.msra.mxu0 %v1211
  %1213 = vmatprep.subr.mxu0 0.0
  %v1214 = vand.u32 %v76, 4294901760
  %v1215 = vsub.f32 %v76, %v1214
  %v1216 = vand.u32 %v1215, 4294901760
  %v1217 = vsub.f32 %v1215, %v1216
  %v1218 = vand.u32 %v1217, 4294901760
  %1219 = vmatpush2.msra.mxu0 %v1218
  %1220 = vmatprep.subr.mxu0 0.0
  %v1221 = vand.u32 %v75, 4294901760
  %v1222 = vsub.f32 %v75, %v1221
  %v1223 = vand.u32 %v1222, 4294901760
  %v1224 = vsub.f32 %v1222, %v1223
  %v1225 = vand.u32 %v1224, 4294901760
  %1226 = vmatpush2.msra.mxu0 %v1225
  %1227 = vmatprep.subr.mxu0 0.0
  %v1228 = vand.u32 %v74, 4294901760
  %v1229 = vsub.f32 %v74, %v1228
  %v1230 = vand.u32 %v1229, 4294901760
  %v1231 = vsub.f32 %v1229, %v1230
  %v1232 = vand.u32 %v1231, 4294901760
  %1233 = vmatpush2.msra.mxu0 %v1232
  %1234 = vmatprep.subr.mxu0 0.0
  %v1235 = vand.u32 %v73, 4294901760
  %v1236 = vsub.f32 %v73, %v1235
  %v1237 = vand.u32 %v1236, 4294901760
  %v1238 = vsub.f32 %v1236, %v1237
  %v1239 = vand.u32 %v1238, 4294901760
  %1240 = vmatpush2.msra.mxu0 %v1239
  %1241 = vmatprep.subr.mxu0 0.0
  %v1242 = vand.u32 %v72, 4294901760
  %v1243 = vsub.f32 %v72, %v1242
  %v1244 = vand.u32 %v1243, 4294901760
  %v1245 = vsub.f32 %v1243, %v1244
  %v1246 = vand.u32 %v1245, 4294901760
  %1247 = vmatpush2.msra.mxu0 %v1246
  %1248 = vmatprep.subr.mxu0 0.0
  %v1249 = vand.u32 %v71, 4294901760
  %v1250 = vsub.f32 %v71, %v1249
  %v1251 = vand.u32 %v1250, 4294901760
  %v1252 = vsub.f32 %v1250, %v1251
  %v1253 = vand.u32 %v1252, 4294901760
  %1254 = vmatpush2.msra.mxu0 %v1253
  %1255 = vmatprep.subr.mxu0 0.0
  %v1256 = vand.u32 %v70, 4294901760
  %v1257 = vsub.f32 %v70, %v1256
  %v1258 = vand.u32 %v1257, 4294901760
  %v1259 = vsub.f32 %v1257, %v1258
  %v1260 = vand.u32 %v1259, 4294901760
  %1261 = vmatpush2.msra.mxu0 %v1260
  %1262 = vmatprep.subr.mxu0 0.0
  %v1263 = vand.u32 %v69, 4294901760
  %v1264 = vsub.f32 %v69, %v1263
  %v1265 = vand.u32 %v1264, 4294901760
  %v1266 = vsub.f32 %v1264, %v1265
  %v1267 = vand.u32 %v1266, 4294901760
  %1268 = vmatpush2.msra.mxu0 %v1267
  %1269 = vmatprep.subr.mxu0 0.0
  %v1270 = vand.u32 %v68, 4294901760
  %v1271 = vsub.f32 %v68, %v1270
  %v1272 = vand.u32 %v1271, 4294901760
  %v1273 = vsub.f32 %v1271, %v1272
  %v1274 = vand.u32 %v1273, 4294901760
  %1275 = vmatpush2.msra.mxu0 %v1274
  %1276 = vmatprep.subr.mxu0 0.0
  %v1277 = vand.u32 %v67, 4294901760
  %v1278 = vsub.f32 %v67, %v1277
  %v1279 = vand.u32 %v1278, 4294901760
  %v1280 = vsub.f32 %v1278, %v1279
  %v1281 = vand.u32 %v1280, 4294901760
  %1282 = vmatpush2.msra.mxu0 %v1281
  %v1283 = vand.u32 %v18, 4294901760
  %1284 = vmatprep.mubr.f32.mxu0 %v1283
  %v1285 = vand.u32 %v17, 4294901760
  %1286 = vmatmul.mubr.f32.gmra.mxu0 %v1285
  %v1287 = vpop.f32.mrf.mxu0
  %v1288 = vadd.f32 %v1056, %v1287
  %v1289 = vpop.f32.mrf.mxu0
  %1290 = vdwg.mxu0
  %1291 = vmatprep.subr.mxu0 0.0
  %v1292 = vand.u32 %v66, 4294901760
  %v1293 = vsub.f32 %v66, %v1292
  %1294 = vmatpush1.msra.mxu0 %v1293
  %1295 = vmatprep.subr.mxu0 0.0
  %v1296 = vand.u32 %v65, 4294901760
  %v1297 = vsub.f32 %v65, %v1296
  %1298 = vmatpush1.msra.mxu0 %v1297
  %1299 = vmatprep.subr.mxu0 0.0
  %v1300 = vand.u32 %v64, 4294901760
  %v1301 = vsub.f32 %v64, %v1300
  %1302 = vmatpush1.msra.mxu0 %v1301
  %1303 = vmatprep.subr.mxu0 0.0
  %v1304 = vand.u32 %v63, 4294901760
  %v1305 = vsub.f32 %v63, %v1304
  %1306 = vmatpush1.msra.mxu0 %v1305
  %1307 = vmatprep.subr.mxu0 0.0
  %v1308 = vand.u32 %v62, 4294901760
  %v1309 = vsub.f32 %v62, %v1308
  %1310 = vmatpush1.msra.mxu0 %v1309
  %1311 = vmatprep.subr.mxu0 0.0
  %v1312 = vand.u32 %v61, 4294901760
  %v1313 = vsub.f32 %v61, %v1312
  %1314 = vmatpush1.msra.mxu0 %v1313
  %1315 = vmatprep.subr.mxu0 0.0
  %v1316 = vand.u32 %v60, 4294901760
  %v1317 = vsub.f32 %v60, %v1316
  %1318 = vmatpush1.msra.mxu0 %v1317
  %1319 = vmatprep.subr.mxu0 0.0
  %v1320 = vand.u32 %v59, 4294901760
  %v1321 = vsub.f32 %v59, %v1320
  %1322 = vmatpush1.msra.mxu0 %v1321
  %1323 = vmatprep.subr.mxu0 0.0
  %v1324 = vand.u32 %v58, 4294901760
  %v1325 = vsub.f32 %v58, %v1324
  %1326 = vmatpush1.msra.mxu0 %v1325
  %1327 = vmatprep.subr.mxu0 0.0
  %v1328 = vand.u32 %v57, 4294901760
  %v1329 = vsub.f32 %v57, %v1328
  %1330 = vmatpush1.msra.mxu0 %v1329
  %1331 = vmatprep.subr.mxu0 0.0
  %v1332 = vand.u32 %v56, 4294901760
  %v1333 = vsub.f32 %v56, %v1332
  %1334 = vmatpush1.msra.mxu0 %v1333
  %1335 = vmatprep.subr.mxu0 0.0
  %v1336 = vand.u32 %v55, 4294901760
  %v1337 = vsub.f32 %v55, %v1336
  %1338 = vmatpush1.msra.mxu0 %v1337
  %1339 = vmatprep.subr.mxu0 0.0
  %v1340 = vand.u32 %v54, 4294901760
  %v1341 = vsub.f32 %v54, %v1340
  %1342 = vmatpush1.msra.mxu0 %v1341
  %1343 = vmatprep.subr.mxu0 0.0
  %v1344 = vand.u32 %v53, 4294901760
  %v1345 = vsub.f32 %v53, %v1344
  %1346 = vmatpush1.msra.mxu0 %v1345
  %1347 = vmatprep.subr.mxu0 0.0
  %v1348 = vand.u32 %v52, 4294901760
  %v1349 = vsub.f32 %v52, %v1348
  %1350 = vmatpush1.msra.mxu0 %v1349
  %1351 = vmatprep.subr.mxu0 0.0
  %v1352 = vand.u32 %v51, 4294901760
  %v1353 = vsub.f32 %v51, %v1352
  %1354 = vmatpush1.msra.mxu0 %v1353
  %1355 = vmatprep.subr.mxu0 0.0
  %v1356 = vand.u32 %v82, 4294901760
  %v1357 = vsub.f32 %v82, %v1356
  %1358 = vmatpush2.msra.mxu0 %v1357
  %1359 = vmatprep.subr.mxu0 0.0
  %v1360 = vand.u32 %v81, 4294901760
  %v1361 = vsub.f32 %v81, %v1360
  %1362 = vmatpush2.msra.mxu0 %v1361
  %1363 = vmatprep.subr.mxu0 0.0
  %v1364 = vand.u32 %v80, 4294901760
  %v1365 = vsub.f32 %v80, %v1364
  %1366 = vmatpush2.msra.mxu0 %v1365
  %1367 = vmatprep.subr.mxu0 0.0
  %v1368 = vand.u32 %v79, 4294901760
  %v1369 = vsub.f32 %v79, %v1368
  %1370 = vmatpush2.msra.mxu0 %v1369
  %1371 = vmatprep.subr.mxu0 0.0
  %v1372 = vand.u32 %v78, 4294901760
  %v1373 = vsub.f32 %v78, %v1372
  %1374 = vmatpush2.msra.mxu0 %v1373
  %1375 = vmatprep.subr.mxu0 0.0
  %v1376 = vand.u32 %v77, 4294901760
  %v1377 = vsub.f32 %v77, %v1376
  %1378 = vmatpush2.msra.mxu0 %v1377
  %1379 = vmatprep.subr.mxu0 0.0
  %v1380 = vand.u32 %v76, 4294901760
  %v1381 = vsub.f32 %v76, %v1380
  %1382 = vmatpush2.msra.mxu0 %v1381
  %1383 = vmatprep.subr.mxu0 0.0
  %v1384 = vand.u32 %v75, 4294901760
  %v1385 = vsub.f32 %v75, %v1384
  %1386 = vmatpush2.msra.mxu0 %v1385
  %1387 = vmatprep.subr.mxu0 0.0
  %v1388 = vand.u32 %v74, 4294901760
  %v1389 = vsub.f32 %v74, %v1388
  %1390 = vmatpush2.msra.mxu0 %v1389
  %1391 = vmatprep.subr.mxu0 0.0
  %v1392 = vand.u32 %v73, 4294901760
  %v1393 = vsub.f32 %v73, %v1392
  %1394 = vmatpush2.msra.mxu0 %v1393
  %1395 = vmatprep.subr.mxu0 0.0
  %v1396 = vand.u32 %v72, 4294901760
  %v1397 = vsub.f32 %v72, %v1396
  %1398 = vmatpush2.msra.mxu0 %v1397
  %1399 = vmatprep.subr.mxu0 0.0
  %v1400 = vand.u32 %v71, 4294901760
  %v1401 = vsub.f32 %v71, %v1400
  %1402 = vmatpush2.msra.mxu0 %v1401
  %1403 = vmatprep.subr.mxu0 0.0
  %v1404 = vand.u32 %v70, 4294901760
  %v1405 = vsub.f32 %v70, %v1404
  %1406 = vmatpush2.msra.mxu0 %v1405
  %1407 = vmatprep.subr.mxu0 0.0
  %v1408 = vand.u32 %v69, 4294901760
  %v1409 = vsub.f32 %v69, %v1408
  %1410 = vmatpush2.msra.mxu0 %v1409
  %1411 = vmatprep.subr.mxu0 0.0
  %v1412 = vand.u32 %v68, 4294901760
  %v1413 = vsub.f32 %v68, %v1412
  %1414 = vmatpush2.msra.mxu0 %v1413
  %1415 = vmatprep.subr.mxu0 0.0
  %v1416 = vand.u32 %v67, 4294901760
  %v1417 = vsub.f32 %v67, %v1416
  %1418 = vmatpush2.msra.mxu0 %v1417
  %v1419 = vand.u32 %v18, 4294901760
  %v1420 = vsub.f32 %v18, %v1419
  %1421 = vmatprep.mubr.f32.mxu0 %v1420
  %v1422 = vand.u32 %v17, 4294901760
  %v1423 = vsub.f32 %v17, %v1422
  %1424 = vmatmul.mubr.f32.gmra.mxu0 %v1423
  %v1425 = vpop.f32.mrf.mxu0
  %v1426 = vadd.f32 %v1288, %v1425
  %v1427 = vpop.f32.mrf.mxu0
  %1428 = vdwg.mxu0
  %1429 = vmatprep.subr.mxu0 0.0
  %v1430 = vand.u32 %v66, 4294901760
  %1431 = vmatpush1.msra.mxu0 %v1430
  %1432 = vmatprep.subr.mxu0 0.0
  %v1433 = vand.u32 %v65, 4294901760
  %1434 = vmatpush1.msra.mxu0 %v1433
  %1435 = vmatprep.subr.mxu0 0.0
  %v1436 = vand.u32 %v64, 4294901760
  %1437 = vmatpush1.msra.mxu0 %v1436
  %1438 = vmatprep.subr.mxu0 0.0
  %v1439 = vand.u32 %v63, 4294901760
  %1440 = vmatpush1.msra.mxu0 %v1439
  %1441 = vmatprep.subr.mxu0 0.0
  %v1442 = vand.u32 %v62, 4294901760
  %1443 = vmatpush1.msra.mxu0 %v1442
  %1444 = vmatprep.subr.mxu0 0.0
  %v1445 = vand.u32 %v61, 4294901760
  %1446 = vmatpush1.msra.mxu0 %v1445
  %1447 = vmatprep.subr.mxu0 0.0
  %v1448 = vand.u32 %v60, 4294901760
  %1449 = vmatpush1.msra.mxu0 %v1448
  %1450 = vmatprep.subr.mxu0 0.0
  %v1451 = vand.u32 %v59, 4294901760
  %1452 = vmatpush1.msra.mxu0 %v1451
  %1453 = vmatprep.subr.mxu0 0.0
  %v1454 = vand.u32 %v58, 4294901760
  %1455 = vmatpush1.msra.mxu0 %v1454
  %1456 = vmatprep.subr.mxu0 0.0
  %v1457 = vand.u32 %v57, 4294901760
  %1458 = vmatpush1.msra.mxu0 %v1457
  %1459 = vmatprep.subr.mxu0 0.0
  %v1460 = vand.u32 %v56, 4294901760
  %1461 = vmatpush1.msra.mxu0 %v1460
  %1462 = vmatprep.subr.mxu0 0.0
  %v1463 = vand.u32 %v55, 4294901760
  %1464 = vmatpush1.msra.mxu0 %v1463
  %1465 = vmatprep.subr.mxu0 0.0
  %v1466 = vand.u32 %v54, 4294901760
  %1467 = vmatpush1.msra.mxu0 %v1466
  %1468 = vmatprep.subr.mxu0 0.0
  %v1469 = vand.u32 %v53, 4294901760
  %1470 = vmatpush1.msra.mxu0 %v1469
  %1471 = vmatprep.subr.mxu0 0.0
  %v1472 = vand.u32 %v52, 4294901760
  %1473 = vmatpush1.msra.mxu0 %v1472
  %1474 = vmatprep.subr.mxu0 0.0
  %v1475 = vand.u32 %v51, 4294901760
  %1476 = vmatpush1.msra.mxu0 %v1475
  %1477 = vmatprep.subr.mxu0 0.0
  %v1478 = vand.u32 %v82, 4294901760
  %1479 = vmatpush2.msra.mxu0 %v1478
  %1480 = vmatprep.subr.mxu0 0.0
  %v1481 = vand.u32 %v81, 4294901760
  %1482 = vmatpush2.msra.mxu0 %v1481
  %1483 = vmatprep.subr.mxu0 0.0
  %v1484 = vand.u32 %v80, 4294901760
  %1485 = vmatpush2.msra.mxu0 %v1484
  %1486 = vmatprep.subr.mxu0 0.0
  %v1487 = vand.u32 %v79, 4294901760
  %1488 = vmatpush2.msra.mxu0 %v1487
  %1489 = vmatprep.subr.mxu0 0.0
  %v1490 = vand.u32 %v78, 4294901760
  %1491 = vmatpush2.msra.mxu0 %v1490
  %1492 = vmatprep.subr.mxu0 0.0
  %v1493 = vand.u32 %v77, 4294901760
  %1494 = vmatpush2.msra.mxu0 %v1493
  %1495 = vmatprep.subr.mxu0 0.0
  %v1496 = vand.u32 %v76, 4294901760
  %1497 = vmatpush2.msra.mxu0 %v1496
  %1498 = vmatprep.subr.mxu0 0.0
  %v1499 = vand.u32 %v75, 4294901760
  %1500 = vmatpush2.msra.mxu0 %v1499
  %1501 = vmatprep.subr.mxu0 0.0
  %v1502 = vand.u32 %v74, 4294901760
  %1503 = vmatpush2.msra.mxu0 %v1502
  %1504 = vmatprep.subr.mxu0 0.0
  %v1505 = vand.u32 %v73, 4294901760
  %1506 = vmatpush2.msra.mxu0 %v1505
  %1507 = vmatprep.subr.mxu0 0.0
  %v1508 = vand.u32 %v72, 4294901760
  %1509 = vmatpush2.msra.mxu0 %v1508
  %1510 = vmatprep.subr.mxu0 0.0
  %v1511 = vand.u32 %v71, 4294901760
  %1512 = vmatpush2.msra.mxu0 %v1511
  %1513 = vmatprep.subr.mxu0 0.0
  %v1514 = vand.u32 %v70, 4294901760
  %1515 = vmatpush2.msra.mxu0 %v1514
  %1516 = vmatprep.subr.mxu0 0.0
  %v1517 = vand.u32 %v69, 4294901760
  %1518 = vmatpush2.msra.mxu0 %v1517
  %1519 = vmatprep.subr.mxu0 0.0
  %v1520 = vand.u32 %v68, 4294901760
  %1521 = vmatpush2.msra.mxu0 %v1520
  %1522 = vmatprep.subr.mxu0 0.0
  %v1523 = vand.u32 %v67, 4294901760
  %1524 = vmatpush2.msra.mxu0 %v1523
  %v1525 = vand.u32 %v18, 4294901760
  %v1526 = vsub.f32 %v18, %v1525
  %v1527 = vand.u32 %v1526, 4294901760
  %1528 = vmatprep.mubr.f32.mxu0 %v1527
  %v1529 = vand.u32 %v17, 4294901760
  %v1530 = vsub.f32 %v17, %v1529
  %v1531 = vand.u32 %v1530, 4294901760
  %1532 = vmatmul.mubr.f32.gmra.mxu0 %v1531
  %v1533 = vpop.f32.mrf.mxu0
  %v1534 = vadd.f32 %v1426, %v1533
  %v1535 = vpop.f32.mrf.mxu0
  %1536 = vdwg.mxu0
  %1537 = vmatprep.subr.mxu0 0.0
  %v1538 = vand.u32 %v66, 4294901760
  %v1539 = vsub.f32 %v66, %v1538
  %v1540 = vand.u32 %v1539, 4294901760
  %1541 = vmatpush1.msra.mxu0 %v1540
  %1542 = vmatprep.subr.mxu0 0.0
  %v1543 = vand.u32 %v65, 4294901760
  %v1544 = vsub.f32 %v65, %v1543
  %v1545 = vand.u32 %v1544, 4294901760
  %1546 = vmatpush1.msra.mxu0 %v1545
  %1547 = vmatprep.subr.mxu0 0.0
  %v1548 = vand.u32 %v64, 4294901760
  %v1549 = vsub.f32 %v64, %v1548
  %v1550 = vand.u32 %v1549, 4294901760
  %1551 = vmatpush1.msra.mxu0 %v1550
  %1552 = vmatprep.subr.mxu0 0.0
  %v1553 = vand.u32 %v63, 4294901760
  %v1554 = vsub.f32 %v63, %v1553
  %v1555 = vand.u32 %v1554, 4294901760
  %1556 = vmatpush1.msra.mxu0 %v1555
  %1557 = vmatprep.subr.mxu0 0.0
  %v1558 = vand.u32 %v62, 4294901760
  %v1559 = vsub.f32 %v62, %v1558
  %v1560 = vand.u32 %v1559, 4294901760
  %1561 = vmatpush1.msra.mxu0 %v1560
  %1562 = vmatprep.subr.mxu0 0.0
  %v1563 = vand.u32 %v61, 4294901760
  %v1564 = vsub.f32 %v61, %v1563
  %v1565 = vand.u32 %v1564, 4294901760
  %1566 = vmatpush1.msra.mxu0 %v1565
  %1567 = vmatprep.subr.mxu0 0.0
  %v1568 = vand.u32 %v60, 4294901760
  %v1569 = vsub.f32 %v60, %v1568
  %v1570 = vand.u32 %v1569, 4294901760
  %1571 = vmatpush1.msra.mxu0 %v1570
  %1572 = vmatprep.subr.mxu0 0.0
  %v1573 = vand.u32 %v59, 4294901760
  %v1574 = vsub.f32 %v59, %v1573
  %v1575 = vand.u32 %v1574, 4294901760
  %1576 = vmatpush1.msra.mxu0 %v1575
  %1577 = vmatprep.subr.mxu0 0.0
  %v1578 = vand.u32 %v58, 4294901760
  %v1579 = vsub.f32 %v58, %v1578
  %v1580 = vand.u32 %v1579, 4294901760
  %1581 = vmatpush1.msra.mxu0 %v1580
  %1582 = vmatprep.subr.mxu0 0.0
  %v1583 = vand.u32 %v57, 4294901760
  %v1584 = vsub.f32 %v57, %v1583
  %v1585 = vand.u32 %v1584, 4294901760
  %1586 = vmatpush1.msra.mxu0 %v1585
  %1587 = vmatprep.subr.mxu0 0.0
  %v1588 = vand.u32 %v56, 4294901760
  %v1589 = vsub.f32 %v56, %v1588
  %v1590 = vand.u32 %v1589, 4294901760
  %1591 = vmatpush1.msra.mxu0 %v1590
  %1592 = vmatprep.subr.mxu0 0.0
  %v1593 = vand.u32 %v55, 4294901760
  %v1594 = vsub.f32 %v55, %v1593
  %v1595 = vand.u32 %v1594, 4294901760
  %1596 = vmatpush1.msra.mxu0 %v1595
  %1597 = vmatprep.subr.mxu0 0.0
  %v1598 = vand.u32 %v54, 4294901760
  %v1599 = vsub.f32 %v54, %v1598
  %v1600 = vand.u32 %v1599, 4294901760
  %1601 = vmatpush1.msra.mxu0 %v1600
  %1602 = vmatprep.subr.mxu0 0.0
  %v1603 = vand.u32 %v53, 4294901760
  %v1604 = vsub.f32 %v53, %v1603
  %v1605 = vand.u32 %v1604, 4294901760
  %1606 = vmatpush1.msra.mxu0 %v1605
  %1607 = vmatprep.subr.mxu0 0.0
  %v1608 = vand.u32 %v52, 4294901760
  %v1609 = vsub.f32 %v52, %v1608
  %v1610 = vand.u32 %v1609, 4294901760
  %1611 = vmatpush1.msra.mxu0 %v1610
  %1612 = vmatprep.subr.mxu0 0.0
  %v1613 = vand.u32 %v51, 4294901760
  %v1614 = vsub.f32 %v51, %v1613
  %v1615 = vand.u32 %v1614, 4294901760
  %1616 = vmatpush1.msra.mxu0 %v1615
  %1617 = vmatprep.subr.mxu0 0.0
  %v1618 = vand.u32 %v82, 4294901760
  %v1619 = vsub.f32 %v82, %v1618
  %v1620 = vand.u32 %v1619, 4294901760
  %1621 = vmatpush2.msra.mxu0 %v1620
  %1622 = vmatprep.subr.mxu0 0.0
  %v1623 = vand.u32 %v81, 4294901760
  %v1624 = vsub.f32 %v81, %v1623
  %v1625 = vand.u32 %v1624, 4294901760
  %1626 = vmatpush2.msra.mxu0 %v1625
  %1627 = vmatprep.subr.mxu0 0.0
  %v1628 = vand.u32 %v80, 4294901760
  %v1629 = vsub.f32 %v80, %v1628
  %v1630 = vand.u32 %v1629, 4294901760
  %1631 = vmatpush2.msra.mxu0 %v1630
  %1632 = vmatprep.subr.mxu0 0.0
  %v1633 = vand.u32 %v79, 4294901760
  %v1634 = vsub.f32 %v79, %v1633
  %v1635 = vand.u32 %v1634, 4294901760
  %1636 = vmatpush2.msra.mxu0 %v1635
  %1637 = vmatprep.subr.mxu0 0.0
  %v1638 = vand.u32 %v78, 4294901760
  %v1639 = vsub.f32 %v78, %v1638
  %v1640 = vand.u32 %v1639, 4294901760
  %1641 = vmatpush2.msra.mxu0 %v1640
  %1642 = vmatprep.subr.mxu0 0.0
  %v1643 = vand.u32 %v77, 4294901760
  %v1644 = vsub.f32 %v77, %v1643
  %v1645 = vand.u32 %v1644, 4294901760
  %1646 = vmatpush2.msra.mxu0 %v1645
  %1647 = vmatprep.subr.mxu0 0.0
  %v1648 = vand.u32 %v76, 4294901760
  %v1649 = vsub.f32 %v76, %v1648
  %v1650 = vand.u32 %v1649, 4294901760
  %1651 = vmatpush2.msra.mxu0 %v1650
  %1652 = vmatprep.subr.mxu0 0.0
  %v1653 = vand.u32 %v75, 4294901760
  %v1654 = vsub.f32 %v75, %v1653
  %v1655 = vand.u32 %v1654, 4294901760
  %1656 = vmatpush2.msra.mxu0 %v1655
  %1657 = vmatprep.subr.mxu0 0.0
  %v1658 = vand.u32 %v74, 4294901760
  %v1659 = vsub.f32 %v74, %v1658
  %v1660 = vand.u32 %v1659, 4294901760
  %1661 = vmatpush2.msra.mxu0 %v1660
  %1662 = vmatprep.subr.mxu0 0.0
  %v1663 = vand.u32 %v73, 4294901760
  %v1664 = vsub.f32 %v73, %v1663
  %v1665 = vand.u32 %v1664, 4294901760
  %1666 = vmatpush2.msra.mxu0 %v1665
  %1667 = vmatprep.subr.mxu0 0.0
  %v1668 = vand.u32 %v72, 4294901760
  %v1669 = vsub.f32 %v72, %v1668
  %v1670 = vand.u32 %v1669, 4294901760
  %1671 = vmatpush2.msra.mxu0 %v1670
  %1672 = vmatprep.subr.mxu0 0.0
  %v1673 = vand.u32 %v71, 4294901760
  %v1674 = vsub.f32 %v71, %v1673
  %v1675 = vand.u32 %v1674, 4294901760
  %1676 = vmatpush2.msra.mxu0 %v1675
  %1677 = vmatprep.subr.mxu0 0.0
  %v1678 = vand.u32 %v70, 4294901760
  %v1679 = vsub.f32 %v70, %v1678
  %v1680 = vand.u32 %v1679, 4294901760
  %1681 = vmatpush2.msra.mxu0 %v1680
  %1682 = vmatprep.subr.mxu0 0.0
  %v1683 = vand.u32 %v69, 4294901760
  %v1684 = vsub.f32 %v69, %v1683
  %v1685 = vand.u32 %v1684, 4294901760
  %1686 = vmatpush2.msra.mxu0 %v1685
  %1687 = vmatprep.subr.mxu0 0.0
  %v1688 = vand.u32 %v68, 4294901760
  %v1689 = vsub.f32 %v68, %v1688
  %v1690 = vand.u32 %v1689, 4294901760
  %1691 = vmatpush2.msra.mxu0 %v1690
  %1692 = vmatprep.subr.mxu0 0.0
  %v1693 = vand.u32 %v67, 4294901760
  %v1694 = vsub.f32 %v67, %v1693
  %v1695 = vand.u32 %v1694, 4294901760
  %1696 = vmatpush2.msra.mxu0 %v1695
  %v1697 = vand.u32 %v18, 4294901760
  %1698 = vmatprep.mubr.f32.mxu0 %v1697
  %v1699 = vand.u32 %v17, 4294901760
  %1700 = vmatmul.mubr.f32.gmra.mxu0 %v1699
  %v1701 = vpop.f32.mrf.mxu0
  %v1702 = vadd.f32 %v1534, %v1701
  %v1703 = vpop.f32.mrf.mxu0
  %1704 = vdwg.mxu0
  %1705 = vmatprep.subr.mxu0 0.0
  %v1706 = vand.u32 %v66, 4294901760
  %1707 = vmatpush1.msra.mxu0 %v1706
  %1708 = vmatprep.subr.mxu0 0.0
  %v1709 = vand.u32 %v65, 4294901760
  %1710 = vmatpush1.msra.mxu0 %v1709
  %1711 = vmatprep.subr.mxu0 0.0
  %v1712 = vand.u32 %v64, 4294901760
  %1713 = vmatpush1.msra.mxu0 %v1712
  %1714 = vmatprep.subr.mxu0 0.0
  %v1715 = vand.u32 %v63, 4294901760
  %1716 = vmatpush1.msra.mxu0 %v1715
  %1717 = vmatprep.subr.mxu0 0.0
  %v1718 = vand.u32 %v62, 4294901760
  %1719 = vmatpush1.msra.mxu0 %v1718
  %1720 = vmatprep.subr.mxu0 0.0
  %v1721 = vand.u32 %v61, 4294901760
  %1722 = vmatpush1.msra.mxu0 %v1721
  %1723 = vmatprep.subr.mxu0 0.0
  %v1724 = vand.u32 %v60, 4294901760
  %1725 = vmatpush1.msra.mxu0 %v1724
  %1726 = vmatprep.subr.mxu0 0.0
  %v1727 = vand.u32 %v59, 4294901760
  %1728 = vmatpush1.msra.mxu0 %v1727
  %1729 = vmatprep.subr.mxu0 0.0
  %v1730 = vand.u32 %v58, 4294901760
  %1731 = vmatpush1.msra.mxu0 %v1730
  %1732 = vmatprep.subr.mxu0 0.0
  %v1733 = vand.u32 %v57, 4294901760
  %1734 = vmatpush1.msra.mxu0 %v1733
  %1735 = vmatprep.subr.mxu0 0.0
  %v1736 = vand.u32 %v56, 4294901760
  %1737 = vmatpush1.msra.mxu0 %v1736
  %1738 = vmatprep.subr.mxu0 0.0
  %v1739 = vand.u32 %v55, 4294901760
  %1740 = vmatpush1.msra.mxu0 %v1739
  %1741 = vmatprep.subr.mxu0 0.0
  %v1742 = vand.u32 %v54, 4294901760
  %1743 = vmatpush1.msra.mxu0 %v1742
  %1744 = vmatprep.subr.mxu0 0.0
  %v1745 = vand.u32 %v53, 4294901760
  %1746 = vmatpush1.msra.mxu0 %v1745
  %1747 = vmatprep.subr.mxu0 0.0
  %v1748 = vand.u32 %v52, 4294901760
  %1749 = vmatpush1.msra.mxu0 %v1748
  %1750 = vmatprep.subr.mxu0 0.0
  %v1751 = vand.u32 %v51, 4294901760
  %1752 = vmatpush1.msra.mxu0 %v1751
  %1753 = vmatprep.subr.mxu0 0.0
  %v1754 = vand.u32 %v82, 4294901760
  %1755 = vmatpush2.msra.mxu0 %v1754
  %1756 = vmatprep.subr.mxu0 0.0
  %v1757 = vand.u32 %v81, 4294901760
  %1758 = vmatpush2.msra.mxu0 %v1757
  %1759 = vmatprep.subr.mxu0 0.0
  %v1760 = vand.u32 %v80, 4294901760
  %1761 = vmatpush2.msra.mxu0 %v1760
  %1762 = vmatprep.subr.mxu0 0.0
  %v1763 = vand.u32 %v79, 4294901760
  %1764 = vmatpush2.msra.mxu0 %v1763
  %1765 = vmatprep.subr.mxu0 0.0
  %v1766 = vand.u32 %v78, 4294901760
  %1767 = vmatpush2.msra.mxu0 %v1766
  %1768 = vmatprep.subr.mxu0 0.0
  %v1769 = vand.u32 %v77, 4294901760
  %1770 = vmatpush2.msra.mxu0 %v1769
  %1771 = vmatprep.subr.mxu0 0.0
  %v1772 = vand.u32 %v76, 4294901760
  %1773 = vmatpush2.msra.mxu0 %v1772
  %1774 = vmatprep.subr.mxu0 0.0
  %v1775 = vand.u32 %v75, 4294901760
  %1776 = vmatpush2.msra.mxu0 %v1775
  %1777 = vmatprep.subr.mxu0 0.0
  %v1778 = vand.u32 %v74, 4294901760
  %1779 = vmatpush2.msra.mxu0 %v1778
  %1780 = vmatprep.subr.mxu0 0.0
  %v1781 = vand.u32 %v73, 4294901760
  %1782 = vmatpush2.msra.mxu0 %v1781
  %1783 = vmatprep.subr.mxu0 0.0
  %v1784 = vand.u32 %v72, 4294901760
  %1785 = vmatpush2.msra.mxu0 %v1784
  %1786 = vmatprep.subr.mxu0 0.0
  %v1787 = vand.u32 %v71, 4294901760
  %1788 = vmatpush2.msra.mxu0 %v1787
  %1789 = vmatprep.subr.mxu0 0.0
  %v1790 = vand.u32 %v70, 4294901760
  %1791 = vmatpush2.msra.mxu0 %v1790
  %1792 = vmatprep.subr.mxu0 0.0
  %v1793 = vand.u32 %v69, 4294901760
  %1794 = vmatpush2.msra.mxu0 %v1793
  %1795 = vmatprep.subr.mxu0 0.0
  %v1796 = vand.u32 %v68, 4294901760
  %1797 = vmatpush2.msra.mxu0 %v1796
  %1798 = vmatprep.subr.mxu0 0.0
  %v1799 = vand.u32 %v67, 4294901760
  %1800 = vmatpush2.msra.mxu0 %v1799
  %v1801 = vand.u32 %v18, 4294901760
  %1802 = vmatprep.mubr.f32.mxu0 %v1801
  %v1803 = vand.u32 %v17, 4294901760
  %1804 = vmatmul.mubr.f32.gmra.mxu0 %v1803
  %v1805 = vpop.f32.mrf.mxu0
  %v1806 = vadd.f32 %v1702, %v1805
  %v1807 = vpop.f32.mrf.mxu0
  %1808 = vdwg.mxu0
  %v1809 = vmul.f32 %v1806, 0.5
  %v1810 = vtanh.pop %v1809
  %v1811 = vmul.f32 %v1810, 0.5
  %v1812 = vadd.f32 %v1811, 0.5
  %1813 = vst [vmem:[%s3] sm:$0xff] %v1812
  // Predicated region
  $region14: #{final_perceptron.1} parent=0 // pred_check
    _
  $region15: #{final_perceptron.1} parent=0 // pred_check_branch
    %1815 = sbr.rel (0) target = $region17
  $region16: #{final_perceptron.1} parent=0 // pred_region
    _
  $region17: #{final_perceptron.1} parent=0 // pred_fallthru
    _
  // Predicated region
  $region18: #{final_perceptron.1} parent=0 // pred_check
    _
  $region19: #{final_perceptron.1} parent=0 // pred_check_branch
    %1817 = sbr.rel (0) target = $region21
  $region20: #{final_perceptron.1} parent=0 // pred_region
    _
  $region21: #{final_perceptron.1} parent=0 // pred_fallthru
    _

</llo_original>
